<compile_context>
chip_gen: v7x
topology: tpu7x:2x2x1
jax: 0.10.0
libtpu: 0.0.40
codegen_flags: <defaults>
</compile_context>

<pallas_src>
import jax
import jax.numpy as jnp
from jax.experimental import pallas as pl
from jax.experimental.pallas import tpu as pltpu

EPS = 1e-5


# ---------------------------------------------------------------------------
# Kernel bodies
# ---------------------------------------------------------------------------

def _conv_tile(x_ref, halo_ref, wx_ref, wr_ref, wd_ref, wdr_ref, cout):
    """Packed 4-parity transposed-conv output for one H tile.

    Returns a (TH*W, 4*Cout) f32 slab; channel blocks are the output parities
    in lexicographic (dy, dx) order: [ee | eo | oe | oo].

    Parity decomposition of ConvTranspose2d(k=3, s=2, p=1, output_padding=1),
    with T[ky*3+kx] = weight[:, :, 2-ky, 2-kx]  (Cin, Cout):
      out[2m  ,2n  ] = x[m,n]@T4
      out[2m  ,2n+1] = x[m,n]@T3 + x[m,n+1]@T5
      out[2m+1,2n  ] = x[m,n]@T1 + x[m+1,n]@T7
      out[2m+1,2n+1] = x[m,n]@T0 + x[m,n+1]@T2 + x[m+1,n]@T6 + x[m+1,n+1]@T8
    The wrapper packs  wx = [T4|T3|T1|T0], wr = [T5|T2], wd = [T7|T6], wdr = T8.
    """
    C = cout
    _, TH, W, Cin = x_ref.shape

    x = x_ref[0]                                     # (TH, W, Cin) bf16
    halo = halo_ref[0]                               # (1,  W, Cin) row below tile
    # Halo-extended tile; the row-down shift is a leading-axis slice of it.
    xe = jnp.concatenate([x, halo], axis=0)          # (TH+1, W, Cin)
    # Single W-shift of the extended tile; xr and xdr are leading-axis slices.
    zcol = jnp.zeros((TH + 1, 1, Cin), dtype=x.dtype)
    xe_r = jnp.concatenate([xe[:, 1:, :], zcol], axis=1)   # x[., n+1]

    R = TH * W
    x2 = x.reshape(R, Cin)                           # x[m, n]
    xd2 = xe[1:].reshape(R, Cin)                     # x[m+1, n]
    xr2 = xe_r[:TH].reshape(R, Cin)                  # x[m, n+1]
    xdr2 = xe_r[1:].reshape(R, Cin)                  # x[m+1, n+1]

    f32 = jnp.float32
    y_x = jnp.dot(x2, wx_ref[...], preferred_element_type=f32)      # (R, 4C)
    y_r = jnp.dot(xr2, wr_ref[...], preferred_element_type=f32)     # (R, 2C)
    y_d = jnp.dot(xd2, wd_ref[...], preferred_element_type=f32)     # (R, 2C)
    y_dr = jnp.dot(xdr2, wdr_ref[...], preferred_element_type=f32)  # (R, C)

    p_ee = y_x[:, 0 * C:1 * C]
    p_eo = y_x[:, 1 * C:2 * C] + y_r[:, 0:C]
    p_oe = y_x[:, 2 * C:3 * C] + y_d[:, 0:C]
    p_oo = y_x[:, 3 * C:4 * C] + y_r[:, C:2 * C] + y_d[:, C:2 * C] + y_dr
    return jnp.concatenate([p_ee, p_eo, p_oe, p_oo], axis=1)        # (R, 4C) f32


def _make_bn_fused_kernel(cout, n_valid):
    """One-pass path: resident per-sample output + in-kernel InstanceNorm."""
    C = cout

    def kernel(x_ref, halo_ref, wx_ref, wr_ref, wd_ref, wdr_ref,
               o_ref, sum_ref, sq_ref):
        h = pl.program_id(1)
        acc = _conv_tile(x_ref, halo_ref, wx_ref, wr_ref, wd_ref, wdr_ref, C)
        R = acc.shape[0]

        @pl.when(h == 0)
        def _init():
            sum_ref[...] = jnp.zeros_like(sum_ref)
            sq_ref[...] = jnp.zeros_like(sq_ref)

        start = pl.multiple_of(h * R, 8)             # TH multiple of 8 -> aligned
        o_ref[0, pl.ds(start, R), :] = acc
        # Fused stats: one reduction over the whole (R, 4C) slab per tile.
        sum_ref[...] += jnp.sum(acc, axis=0, keepdims=True)
        sq_ref[...] += jnp.sum(acc * acc, axis=0, keepdims=True)

        @pl.when(h == pl.num_programs(1) - 1)
        def _finalize():
            inv_n = 1.0 / float(n_valid)
            s = sum_ref[...]                          # (1, 4C)
            q = sq_ref[...]
            # Fold the 4 parity blocks into per-channel stats.
            s_c = s[:, 0:C] + s[:, C:2 * C] + s[:, 2 * C:3 * C] + s[:, 3 * C:4 * C]
            q_c = q[:, 0:C] + q[:, C:2 * C] + q[:, 2 * C:3 * C] + q[:, 3 * C:4 * C]
            mean = s_c * inv_n                        # (1, C)
            # Single-pass variance in f32; clamp guards tiny negatives from
            # cancellation.  TODO(synk): shifted two-pass formula if CycleGAN
            # activations ever get large enough for E[y^2]-mean^2 to lose bits.
            var = jnp.maximum(q_c * inv_n - mean * mean, 0.0)
            inv_std = jax.lax.rsqrt(var + EPS)
            mean4 = jnp.concatenate([mean] * 4, axis=1).reshape(1, 1, 4 * C)
            inv4 = jnp.concatenate([inv_std] * 4, axis=1).reshape(1, 1, 4 * C)
            o_ref[...] = jnp.maximum((o_ref[...] - mean4) * inv4, 0.0)

    return kernel


def _make_bn_split_kernel(cout):
    """Two-pass path (large resident block / v7x): raw conv + per-tile stats."""
    C = cout

    def kernel(x_ref, halo_ref, wx_ref, wr_ref, wd_ref, wdr_ref,
               o_ref, stat_ref):
        acc = _conv_tile(x_ref, halo_ref, wx_ref, wr_ref, wd_ref, wdr_ref, C)
        o_ref[0] = acc
        ts = jnp.sum(acc, axis=0, keepdims=True)
        tq = jnp.sum(acc * acc, axis=0, keepdims=True)
        stat_ref[0, 0] = jnp.concatenate([ts, tq], axis=0)    # (2, 4C)

    return kernel


def _make_plain_kernel(cout):
    """use_bn=False path: conv + bias + ReLU."""
    C = cout

    def kernel(x_ref, halo_ref, wx_ref, wr_ref, wd_ref, wdr_ref, b_ref, o_ref):
        acc = _conv_tile(x_ref, halo_ref, wx_ref, wr_ref, wd_ref, wdr_ref, C)
        o_ref[0] = jnp.maximum(acc + b_ref[...], 0.0)

    return kernel


# ---------------------------------------------------------------------------
# Planning helpers
# ---------------------------------------------------------------------------

def _vmem_capacity_bytes():
    try:
        info = pltpu.get_tpu_info()
        for name in ("vmem_capacity_bytes", "vmem_size_bytes", "vmem_bytes"):
            v = getattr(info, name, None)
            if v:
                return int(v)
    except Exception:
        pass
    return 128 * 1024 * 1024


def _pick_tile_h(H, W, Cin, Cout, capacity):
    """H tile: multiple of 8, sized so the f32 output tile stays around
    capacity/16 (~8 MiB on 128-MiB parts, ~4 MiB on v7x), with >=2 tiles when
    H allows (DMA/compute overlap).  Returns (TH, padded H)."""
    target = max(2 << 20, capacity // 16)
    per_row = W * max(4 * Cout * 4, Cin * 2)     # f32 out row vs bf16 in row
    th = max(8, (target // max(per_row, 1)) // 8 * 8)
    hp8 = ((H + 7) // 8) * 8
    th = min(th, hp8)
    while th > 8 and -(-H // th) < 2:
        th -= 8
    hp = -(-H // th) * th
    return th, hp


# ---------------------------------------------------------------------------
# Wrapper
# ---------------------------------------------------------------------------

def expanding_block(x, weight, bias, use_bn=True, residency="auto"):
    """ExpandingBlock forward.

    x:      (N, Cin, H, W)   float32, NCHW (PyTorch layout)
    weight: (Cin, Cout, 3, 3) ConvTranspose2d weight (Cout = Cin // 2)
    bias:   (Cout,)
    residency: "auto" | "fused" | "split" -- InstanceNorm strategy when use_bn.
    returns (N, Cout, 2H, 2W) float32, NCHW
    """
    N, Cin, H, W = x.shape
    Cout = weight.shape[1]
    C4 = 4 * Cout

    cap = _vmem_capacity_bytes()
    TH, Hp = _pick_tile_h(H, W, Cin, Cout, cap)
    n_tiles = Hp // TH
    RT = TH * W
    # Leave headroom below physical VMEM (~48 MiB on v7x, ~96 MiB on v5e/v6e).
    vmem_limit = max(32 << 20, min(3 * cap // 4, cap - (16 << 20)))

    # One-pass (resident output) vs two-pass InstanceNorm.
    resident = Hp * W * C4 * 4
    working = (4 * RT * Cin * 2 + 5 * RT * C4 * 4
               + 2 * 9 * Cin * Cout * 2 + (2 << 20))
    if residency == "auto":
        fused = use_bn and (2 * resident + working <= vmem_limit)
    else:
        fused = use_bn and residency == "fused"

    # Channels-last bf16 input; cast fuses into the layout transpose.  No
    # padded full duplicate -- only H padding (if needed) and 1 halo row/tile.
    x_cl = jnp.transpose(x, (0, 2, 3, 1)).astype(jnp.bfloat16)        # (N, H, W, Cin)
    if Hp > H:
        x_cl = jnp.pad(x_cl, ((0, 0), (0, Hp - H), (0, 0), (0, 0)))
    zrow = jnp.zeros((N, 1, W, Cin), jnp.bfloat16)
    if n_tiles > 1:
        x_halo = jnp.concatenate([x_cl[:, TH:Hp:TH], zrow], axis=1)   # (N, n_tiles, W, Cin)
    else:
        x_halo = zrow

    # Fused per-shift weight matrices (see _conv_tile docstring).
    w_eq = jnp.flip(weight, axis=(2, 3)).transpose(1, 0, 2, 3)        # (Cout, Cin, 3, 3)
    taps = w_eq.transpose(2, 3, 1, 0).reshape(9, Cin, Cout)           # taps[ky*3+kx]
    bf = jnp.bfloat16
    w_x = jnp.concatenate([taps[4], taps[3], taps[1], taps[0]], axis=1).astype(bf)  # (Cin, 4C)
    w_r = jnp.concatenate([taps[5], taps[2]], axis=1).astype(bf)                    # (Cin, 2C)
    w_d = jnp.concatenate([taps[7], taps[6]], axis=1).astype(bf)                    # (Cin, 2C)
    w_dr = taps[8].astype(bf)                                                        # (Cin, C)

    in_specs = [
        pl.BlockSpec((1, TH, W, Cin), lambda n, h: (n, h, 0, 0)),
        pl.BlockSpec((1, 1, W, Cin), lambda n, h: (n, h, 0, 0)),
        pl.BlockSpec((Cin, 4 * Cout), lambda n, h: (0, 0)),   # resident weights
        pl.BlockSpec((Cin, 2 * Cout), lambda n, h: (0, 0)),
        pl.BlockSpec((Cin, 2 * Cout), lambda n, h: (0, 0)),
        pl.BlockSpec((Cin, Cout), lambda n, h: (0, 0)),
    ]
    inputs = [x_cl, x_halo, w_x, w_r, w_d, w_dr]

    if use_bn and fused:
        # Conv bias dropped: non-affine InstanceNorm cancels per-channel offsets.
        kernel = _make_bn_fused_kernel(Cout, 4 * H * W)
        out_shape = jax.ShapeDtypeStruct((N, Hp * W, C4), jnp.float32)
        out_specs = pl.BlockSpec((1, Hp * W, C4), lambda n, h: (n, 0, 0))
        scratch = [pltpu.VMEM((1, C4), jnp.float32),
                   pltpu.VMEM((1, C4), jnp.float32)]
        # h is a reduction axis (stats + resident block) -> arbitrary.
        # TODO(synk): for N=1 on v7x this path uses one TensorCore; the split
        # path below (both axes parallel) is preferred there for large inputs.
        semantics = ("parallel", "arbitrary")
    elif use_bn:
        kernel = _make_bn_split_kernel(Cout)
        out_shape = (jax.ShapeDtypeStruct((N, Hp * W, C4), jnp.float32),
                     jax.ShapeDtypeStruct((N, n_tiles, 2, C4), jnp.float32))
        out_specs = (pl.BlockSpec((1, RT, C4), lambda n, h: (n, h, 0)),
                     pl.BlockSpec((1, 1, 2, C4), lambda n, h: (n, h, 0, 0)))
        scratch = []
        semantics = ("parallel", "parallel")
    else:
        kernel = _make_plain_kernel(Cout)
        in_specs.append(pl.BlockSpec((1, C4), lambda n, h: (0, 0)))
        inputs.append(jnp.tile(bias.astype(jnp.float32), 4).reshape(1, C4))
        out_shape = jax.ShapeDtypeStruct((N, Hp * W, C4), jnp.float32)
        out_specs = pl.BlockSpec((1, RT, C4), lambda n, h: (n, h, 0))
        scratch = []
        semantics = ("parallel", "parallel")

    result = pl.pallas_call(
        kernel,
        out_shape=out_shape,
        grid_spec=pltpu.PrefetchScalarGridSpec(
            num_scalar_prefetch=0,
            grid=(N, n_tiles),
            in_specs=in_specs,
            out_specs=out_specs,
            scratch_shapes=scratch,
        ),
        compiler_params=pltpu.CompilerParams(
            dimension_semantics=semantics,
            vmem_limit_bytes=int(vmem_limit),
        ),
    )(*inputs)

    if use_bn and not fused:
        packed, stats = result
        s = jnp.sum(stats, axis=1)                                    # (N, 2, 4C)
        s_c = s[:, 0].reshape(N, 4, Cout).sum(axis=1)                 # (N, C)
        q_c = s[:, 1].reshape(N, 4, Cout).sum(axis=1)
        inv_n = 1.0 / (4.0 * H * W)
        mean = s_c * inv_n
        var = jnp.maximum(q_c * inv_n - mean * mean, 0.0)
        inv_std = jax.lax.rsqrt(var + EPS)
        mean4 = jnp.tile(mean, (1, 4))[:, None, :]                    # (N, 1, 4C)
        inv4 = jnp.tile(inv_std, (1, 4))[:, None, :]
        # Normalize + ReLU fuse into the (unavoidable) NCHW un-shuffle below.
        packed = jnp.maximum((packed - mean4) * inv4, 0.0)
    else:
        packed = result

    # Parity un-shuffle + NCHW: rides the single output transpose.
    # TODO(synk): expose a packed (N, H, W, 4*Cout) output mode so downstream
    # blocks can skip this extra HBM pass on v5e/v6e.
    y = packed.reshape(N, Hp, W, 2, 2, Cout)[:, :H]
    return y.transpose(0, 5, 1, 3, 2, 4).reshape(N, Cout, 2 * H, 2 * W)


# ---------------------------------------------------------------------------
# Reference & self-test
# ---------------------------------------------------------------------------

def _reference(x, weight, bias, use_bn=True):
    """Pure-JAX reference (ConvTranspose2d via dilated conv)."""
    w_eq = jnp.flip(weight, axis=(2, 3)).transpose(1, 0, 2, 3)   # (Cout, Cin, 3, 3)
    y = jax.lax.conv_general_dilated(
        x, w_eq, window_strides=(1, 1),
        padding=((1, 2), (1, 2)), lhs_dilation=(2, 2),
        dimension_numbers=("NCHW", "OIHW", "NCHW"),
        precision=jax.lax.Precision.HIGHEST,
    ) + bias.reshape(1, -1, 1, 1)
    if use_bn:
        mean = jnp.mean(y, axis=(2, 3), keepdims=True)
        var = jnp.mean((y - mean) ** 2, axis=(2, 3), keepdims=True)
        y = (y - mean) * jax.lax.rsqrt(var + EPS)
    return jnp.maximum(y, 0.0)


if __name__ == "__main__":
    key = jax.random.PRNGKey(0)
    N, Cin, H, W = 2, 4, 16, 16
    Cout = Cin // 2

    kx, kw, kb = jax.random.split(key, 3)
    x = jax.random.normal(kx, (N, Cin, H, W), dtype=jnp.float32)
    weight = 0.1 * jax.random.normal(kw, (Cin, Cout, 3, 3), dtype=jnp.float32)
    bias = 0.1 * jax.random.normal(kb, (Cout,), dtype=jnp.float32)

    # Reference uses the same bf16-rounded operands the kernel feeds the MXU;
    # error vs a full-fp32 PyTorch module is bounded by that (acceptable for
    # GAN inference).
    x_bf = x.astype(jnp.bfloat16).astype(jnp.float32)
    w_bf = weight.astype(jnp.bfloat16).astype(jnp.float32)

    # One-pass InstanceNorm path (resident output).
    out = jax.block_until_ready(expanding_block(x, weight, bias, use_bn=True))
    assert out.shape == (N, Cout, 2 * H, 2 * W), out.shape
    ref = _reference(x_bf, w_bf, bias, use_bn=True)
    err = float(jnp.max(jnp.abs(out - ref)))
    assert jnp.allclose(out, ref, atol=1e-2, rtol=1e-2), err

    # Two-pass InstanceNorm path (large-activation / v7x fallback).
    out_sp = jax.block_until_ready(
        expanding_block(x, weight, bias, use_bn=True, residency="split"))
    err_sp = float(jnp.max(jnp.abs(out_sp - ref)))
    assert jnp.allclose(out_sp, ref, atol=1e-2, rtol=1e-2), err_sp

    # Conv + bias + ReLU path (use_bn=False).
    out_nb = jax.block_until_ready(expanding_block(x, weight, bias, use_bn=False))
    ref_nb = _reference(x_bf, w_bf, bias, use_bn=False)
    err_nb = float(jnp.max(jnp.abs(out_nb - ref_nb)))
    assert jnp.allclose(out_nb, ref_nb, atol=1e-2, rtol=1e-2), err_nb

    print("KERNEL_OK")
</pallas_src>

<mosaic_0001>
module attributes {stable_mosaic.version = 11 : i64} {
  func.func @kernel(%arg0: i32, %arg1: i32, %arg2: memref<1x8x16x4xbf16, #tpu.memory_space<vmem>>, %arg3: memref<1x1x16x4xbf16, #tpu.memory_space<vmem>>, %arg4: memref<4x8xbf16, #tpu.memory_space<vmem>>, %arg5: memref<4x4xbf16, #tpu.memory_space<vmem>>, %arg6: memref<4x4xbf16, #tpu.memory_space<vmem>>, %arg7: memref<4x2xbf16, #tpu.memory_space<vmem>>, %arg8: memref<1x256x8xf32, #tpu.memory_space<vmem>>, %arg9: memref<1x8xf32, #tpu.memory_space<vmem>>, %arg10: memref<1x8xf32, #tpu.memory_space<vmem>>) attributes {dimension_semantics = [#tpu.dimension_semantics<parallel>, #tpu.dimension_semantics<arbitrary>], iteration_bounds = array<i64: 2, 2>, scalar_prefetch = 0 : i64, scratch_operands = 2 : i64, tpu.core_type = #tpu.core_type<tc>, window_params = [{transform_indices = @transform_0, window_bounds = array<i64: 1, 8, 16, 4>}, {transform_indices = @transform_1, window_bounds = array<i64: 1, 1, 16, 4>}, {pipeline_mode = #tpu.pipeline_mode<synchronous>, transform_indices = @transform_2, window_bounds = array<i64: 4, 8>}, {pipeline_mode = #tpu.pipeline_mode<synchronous>, transform_indices = @transform_3, window_bounds = array<i64: 4, 4>}, {pipeline_mode = #tpu.pipeline_mode<synchronous>, transform_indices = @transform_4, window_bounds = array<i64: 4, 4>}, {pipeline_mode = #tpu.pipeline_mode<synchronous>, transform_indices = @transform_5, window_bounds = array<i64: 4, 2>}, {transform_indices = @transform_6, window_bounds = array<i64: 1, 256, 8>}]} {
    %c0 = arith.constant 0 : index
    %c0_0 = arith.constant 0 : index
    %c0_1 = arith.constant 0 : index
    %c0_2 = arith.constant 0 : index
    %0 = vector.load %arg2[%c0, %c0_0, %c0_1, %c0_2] : memref<1x8x16x4xbf16, #tpu.memory_space<vmem>>, vector<1x8x16x4xbf16>
    %1 = vector.shape_cast %0 : vector<1x8x16x4xbf16> to vector<8x16x4xbf16>
    %c0_3 = arith.constant 0 : index
    %c0_4 = arith.constant 0 : index
    %c0_5 = arith.constant 0 : index
    %c0_6 = arith.constant 0 : index
    %2 = vector.load %arg3[%c0_3, %c0_4, %c0_5, %c0_6] : memref<1x1x16x4xbf16, #tpu.memory_space<vmem>>, vector<1x1x16x4xbf16>
    %3 = vector.shape_cast %2 : vector<1x1x16x4xbf16> to vector<1x16x4xbf16>
    %4 = tpu.concatenate %1, %3 in 0 : vector<8x16x4xbf16>, vector<1x16x4xbf16> -> vector<9x16x4xbf16>
    %cst = arith.constant 0.000000e+00 : bf16
    %5 = vector.broadcast %cst : bf16 to vector<9x1x4xbf16>
    %6 = vector.extract_strided_slice %4 {offsets = [0, 1, 0], sizes = [9, 15, 4], strides = [1, 1, 1]} : vector<9x16x4xbf16> to vector<9x15x4xbf16>
    %7 = tpu.concatenate %6, %5 in 1 : vector<9x15x4xbf16>, vector<9x1x4xbf16> -> vector<9x16x4xbf16>
    %8 = vector.shape_cast %1 : vector<8x16x4xbf16> to vector<128x4xbf16>
    %9 = vector.extract_strided_slice %4 {offsets = [1, 0, 0], sizes = [8, 16, 4], strides = [1, 1, 1]} : vector<9x16x4xbf16> to vector<8x16x4xbf16>
    %10 = vector.shape_cast %9 : vector<8x16x4xbf16> to vector<128x4xbf16>
    %11 = vector.extract_strided_slice %7 {offsets = [0, 0, 0], sizes = [8, 16, 4], strides = [1, 1, 1]} : vector<9x16x4xbf16> to vector<8x16x4xbf16>
    %12 = vector.shape_cast %11 : vector<8x16x4xbf16> to vector<128x4xbf16>
    %13 = vector.extract_strided_slice %7 {offsets = [1, 0, 0], sizes = [8, 16, 4], strides = [1, 1, 1]} : vector<9x16x4xbf16> to vector<8x16x4xbf16>
    %14 = vector.shape_cast %13 : vector<8x16x4xbf16> to vector<128x4xbf16>
    %c0_7 = arith.constant 0 : index
    %c0_8 = arith.constant 0 : index
    %15 = vector.load %arg4[%c0_7, %c0_8] : memref<4x8xbf16, #tpu.memory_space<vmem>>, vector<4x8xbf16>
    %cst_9 = arith.constant dense<0.000000e+00> : vector<128x8xf32>
    %16 = tpu.matmul %8, %15, %cst_9 {dimension_numbers = #tpu.dot_dimension_numbers<[1], [0], [0], [1], [0, 0, 1, 1], [], []>} : vector<128x4xbf16>, vector<4x8xbf16>, vector<128x8xf32> -> vector<128x8xf32>
    %c0_10 = arith.constant 0 : index
    %c0_11 = arith.constant 0 : index
    %17 = vector.load %arg5[%c0_10, %c0_11] : memref<4x4xbf16, #tpu.memory_space<vmem>>, vector<4x4xbf16>
    %cst_12 = arith.constant dense<0.000000e+00> : vector<128x4xf32>
    %18 = tpu.matmul %12, %17, %cst_12 {dimension_numbers = #tpu.dot_dimension_numbers<[1], [0], [0], [1], [0, 0, 1, 1], [], []>} : vector<128x4xbf16>, vector<4x4xbf16>, vector<128x4xf32> -> vector<128x4xf32>
    %c0_13 = arith.constant 0 : index
    %c0_14 = arith.constant 0 : index
    %19 = vector.load %arg6[%c0_13, %c0_14] : memref<4x4xbf16, #tpu.memory_space<vmem>>, vector<4x4xbf16>
    %cst_15 = arith.constant dense<0.000000e+00> : vector<128x4xf32>
    %20 = tpu.matmul %10, %19, %cst_15 {dimension_numbers = #tpu.dot_dimension_numbers<[1], [0], [0], [1], [0, 0, 1, 1], [], []>} : vector<128x4xbf16>, vector<4x4xbf16>, vector<128x4xf32> -> vector<128x4xf32>
    %c0_16 = arith.constant 0 : index
    %c0_17 = arith.constant 0 : index
    %21 = vector.load %arg7[%c0_16, %c0_17] : memref<4x2xbf16, #tpu.memory_space<vmem>>, vector<4x2xbf16>
    %cst_18 = arith.constant dense<0.000000e+00> : vector<128x2xf32>
    %22 = tpu.matmul %14, %21, %cst_18 {dimension_numbers = #tpu.dot_dimension_numbers<[1], [0], [0], [1], [0, 0, 1, 1], [], []>} : vector<128x4xbf16>, vector<4x2xbf16>, vector<128x2xf32> -> vector<128x2xf32>
    %23 = vector.extract_strided_slice %16 {offsets = [0, 0], sizes = [128, 2], strides = [1, 1]} : vector<128x8xf32> to vector<128x2xf32>
    %24 = vector.extract_strided_slice %16 {offsets = [0, 2], sizes = [128, 2], strides = [1, 1]} : vector<128x8xf32> to vector<128x2xf32>
    %25 = vector.extract_strided_slice %18 {offsets = [0, 0], sizes = [128, 2], strides = [1, 1]} : vector<128x4xf32> to vector<128x2xf32>
    %26 = arith.addf %24, %25 : vector<128x2xf32>
    %27 = vector.extract_strided_slice %16 {offsets = [0, 4], sizes = [128, 2], strides = [1, 1]} : vector<128x8xf32> to vector<128x2xf32>
    %28 = vector.extract_strided_slice %20 {offsets = [0, 0], sizes = [128, 2], strides = [1, 1]} : vector<128x4xf32> to vector<128x2xf32>
    %29 = arith.addf %27, %28 : vector<128x2xf32>
    %30 = vector.extract_strided_slice %16 {offsets = [0, 6], sizes = [128, 2], strides = [1, 1]} : vector<128x8xf32> to vector<128x2xf32>
    %31 = vector.extract_strided_slice %18 {offsets = [0, 2], sizes = [128, 2], strides = [1, 1]} : vector<128x4xf32> to vector<128x2xf32>
    %32 = arith.addf %30, %31 : vector<128x2xf32>
    %33 = vector.extract_strided_slice %20 {offsets = [0, 2], sizes = [128, 2], strides = [1, 1]} : vector<128x4xf32> to vector<128x2xf32>
    %34 = arith.addf %32, %33 : vector<128x2xf32>
    %35 = arith.addf %34, %22 : vector<128x2xf32>
    %36 = tpu.concatenate %23, %26, %29, %35 in 1 : vector<128x2xf32>, vector<128x2xf32>, vector<128x2xf32>, vector<128x2xf32> -> vector<128x8xf32>
    %c0_i32 = arith.constant 0 : i32
    %37 = arith.cmpi eq, %arg1, %c0_i32 : i32
    %38 = arith.extui %37 : i1 to i32
    %c0_i32_19 = arith.constant 0 : i32
    %39 = arith.cmpi ne, %38, %c0_i32_19 : i32
    scf.if %39 {
      %cst_33 = arith.constant 0.000000e+00 : f32
      %60 = vector.broadcast %cst_33 : f32 to vector<1x8xf32>
      %c0_34 = arith.constant 0 : index
      %c0_35 = arith.constant 0 : index
      %61 = vector.load %arg9[%c0_34, %c0_35] : memref<1x8xf32, #tpu.memory_space<vmem>>, vector<1x8xf32>
      tpu.vector_store %arg9[%c0_34, %c0_35], %60 {strides = array<i32>} : memref<1x8xf32, #tpu.memory_space<vmem>>, vector<1x8xf32>,
      %cst_36 = arith.constant 0.000000e+00 : f32
      %62 = vector.broadcast %cst_36 : f32 to vector<1x8xf32>
      %c0_37 = arith.constant 0 : index
      %c0_38 = arith.constant 0 : index
      %63 = vector.load %arg10[%c0_37, %c0_38] : memref<1x8xf32, #tpu.memory_space<vmem>>, vector<1x8xf32>
      tpu.vector_store %arg10[%c0_37, %c0_38], %62 {strides = array<i32>} : memref<1x8xf32, #tpu.memory_space<vmem>>, vector<1x8xf32>,
    } else {
    }
    %c128_i32 = arith.constant 128 : i32
    %40 = arith.muli %arg1, %c128_i32 : i32
    %41 = tpu.assume_multiple %40, 8 : i32
    %c0_20 = arith.constant 0 : index
    %42 = arith.index_cast %41 : i32 to index
    %c0_21 = arith.constant 0 : index
    %43 = vector.load %arg8[%c0_20, %42, %c0_21] : memref<1x256x8xf32, #tpu.memory_space<vmem>>, vector<1x128x8xf32>
    %44 = vector.shape_cast %43 : vector<1x128x8xf32> to vector<128x8xf32>
    %45 = vector.shape_cast %36 : vector<128x8xf32> to vector<1x128x8xf32>
    tpu.vector_store %arg8[%c0_20, %42, %c0_21], %45 {strides = array<i32>} : memref<1x256x8xf32, #tpu.memory_space<vmem>>, vector<1x128x8xf32>,
    %c0_22 = arith.constant 0 : index
    %c0_23 = arith.constant 0 : index
    %46 = vector.load %arg9[%c0_22, %c0_23] : memref<1x8xf32, #tpu.memory_space<vmem>>, vector<1x8xf32>
    %cst_24 = arith.constant dense<0.000000e+00> : vector<8xf32>
    %47 = vector.multi_reduction <add>, %36, %cst_24 [0] : vector<128x8xf32> to vector<8xf32>
    %48 = vector.shape_cast %47 : vector<8xf32> to vector<1x8xf32>
    %49 = arith.addf %46, %48 : vector<1x8xf32>
    %c0_25 = arith.constant 0 : index
    %c0_26 = arith.constant 0 : index
    %50 = vector.load %arg9[%c0_25, %c0_26] : memref<1x8xf32, #tpu.memory_space<vmem>>, vector<1x8xf32>
    tpu.vector_store %arg9[%c0_25, %c0_26], %49 {strides = array<i32>} : memref<1x8xf32, #tpu.memory_space<vmem>>, vector<1x8xf32>,
    %c0_27 = arith.constant 0 : index
    %c0_28 = arith.constant 0 : index
    %51 = vector.load %arg10[%c0_27, %c0_28] : memref<1x8xf32, #tpu.memory_space<vmem>>, vector<1x8xf32>
    %52 = arith.mulf %36, %36 : vector<128x8xf32>
    %cst_29 = arith.constant dense<0.000000e+00> : vector<8xf32>
    %53 = vector.multi_reduction <add>, %52, %cst_29 [0] : vector<128x8xf32> to vector<8xf32>
    %54 = vector.shape_cast %53 : vector<8xf32> to vector<1x8xf32>
    %55 = arith.addf %51, %54 : vector<1x8xf32>
    %c0_30 = arith.constant 0 : index
    %c0_31 = arith.constant 0 : index
    %56 = vector.load %arg10[%c0_30, %c0_31] : memref<1x8xf32, #tpu.memory_space<vmem>>, vector<1x8xf32>
    tpu.vector_store %arg10[%c0_30, %c0_31], %55 {strides = array<i32>} : memref<1x8xf32, #tpu.memory_space<vmem>>, vector<1x8xf32>,
    %c1_i32 = arith.constant 1 : i32
    %57 = arith.cmpi eq, %arg1, %c1_i32 : i32
    %58 = arith.extui %57 : i1 to i32
    %c0_i32_32 = arith.constant 0 : i32
    %59 = arith.cmpi ne, %58, %c0_i32_32 : i32
    scf.if %59 {
      %c0_33 = arith.constant 0 : index
      %c0_34 = arith.constant 0 : index
      %60 = vector.load %arg9[%c0_33, %c0_34] : memref<1x8xf32, #tpu.memory_space<vmem>>, vector<1x8xf32>
      %c0_35 = arith.constant 0 : index
      %c0_36 = arith.constant 0 : index
      %61 = vector.load %arg10[%c0_35, %c0_36] : memref<1x8xf32, #tpu.memory_space<vmem>>, vector<1x8xf32>
      %62 = vector.extract_strided_slice %60 {offsets = [0, 0], sizes = [1, 2], strides = [1, 1]} : vector<1x8xf32> to vector<1x2xf32>
      %63 = vector.extract_strided_slice %60 {offsets = [0, 2], sizes = [1, 2], strides = [1, 1]} : vector<1x8xf32> to vector<1x2xf32>
      %64 = arith.addf %62, %63 : vector<1x2xf32>
      %65 = vector.extract_strided_slice %60 {offsets = [0, 4], sizes = [1, 2], strides = [1, 1]} : vector<1x8xf32> to vector<1x2xf32>
      %66 = arith.addf %64, %65 : vector<1x2xf32>
      %67 = vector.extract_strided_slice %60 {offsets = [0, 6], sizes = [1, 2], strides = [1, 1]} : vector<1x8xf32> to vector<1x2xf32>
      %68 = arith.addf %66, %67 : vector<1x2xf32>
      %69 = vector.extract_strided_slice %61 {offsets = [0, 0], sizes = [1, 2], strides = [1, 1]} : vector<1x8xf32> to vector<1x2xf32>
      %70 = vector.extract_strided_slice %61 {offsets = [0, 2], sizes = [1, 2], strides = [1, 1]} : vector<1x8xf32> to vector<1x2xf32>
      %71 = arith.addf %69, %70 : vector<1x2xf32>
      %72 = vector.extract_strided_slice %61 {offsets = [0, 4], sizes = [1, 2], strides = [1, 1]} : vector<1x8xf32> to vector<1x2xf32>
      %73 = arith.addf %71, %72 : vector<1x2xf32>
      %74 = vector.extract_strided_slice %61 {offsets = [0, 6], sizes = [1, 2], strides = [1, 1]} : vector<1x8xf32> to vector<1x2xf32>
      %75 = arith.addf %73, %74 : vector<1x2xf32>
      %cst_37 = arith.constant 9.765625E-4 : f32
      %76 = vector.broadcast %cst_37 : f32 to vector<1x2xf32>
      %77 = arith.mulf %68, %76 : vector<1x2xf32>
      %cst_38 = arith.constant 9.765625E-4 : f32
      %78 = vector.broadcast %cst_38 : f32 to vector<1x2xf32>
      %79 = arith.mulf %75, %78 : vector<1x2xf32>
      %80 = arith.mulf %77, %77 : vector<1x2xf32>
      %81 = arith.subf %79, %80 : vector<1x2xf32>
      %cst_39 = arith.constant 0.000000e+00 : f32
      %82 = vector.broadcast %cst_39 : f32 to vector<1x2xf32>
      %83 = arith.maximumf %81, %82 : vector<1x2xf32>
      %cst_40 = arith.constant 9.99999974E-6 : f32
      %84 = vector.broadcast %cst_40 : f32 to vector<1x2xf32>
      %85 = arith.addf %83, %84 : vector<1x2xf32>
      %86 = math.rsqrt %85 : vector<1x2xf32>
      %87 = tpu.concatenate %77, %77, %77, %77 in 1 : vector<1x2xf32>, vector<1x2xf32>, vector<1x2xf32>, vector<1x2xf32> -> vector<1x8xf32>
      %88 = vector.shape_cast %87 : vector<1x8xf32> to vector<1x1x8xf32>
      %89 = tpu.concatenate %86, %86, %86, %86 in 1 : vector<1x2xf32>, vector<1x2xf32>, vector<1x2xf32>, vector<1x2xf32> -> vector<1x8xf32>
      %90 = vector.shape_cast %89 : vector<1x8xf32> to vector<1x1x8xf32>
      %c0_41 = arith.constant 0 : index
      %c0_42 = arith.constant 0 : index
      %c0_43 = arith.constant 0 : index
      %91 = vector.load %arg8[%c0_41, %c0_42, %c0_43] : memref<1x256x8xf32, #tpu.memory_space<vmem>>, vector<1x256x8xf32>
      %92 = vector.broadcast %88 : vector<1x1x8xf32> to vector<1x256x8xf32>
      %93 = arith.subf %91, %92 : vector<1x256x8xf32>
      %94 = vector.broadcast %90 : vector<1x1x8xf32> to vector<1x256x8xf32>
      %95 = arith.mulf %93, %94 : vector<1x256x8xf32>
      %cst_44 = arith.constant 0.000000e+00 : f32
      %96 = vector.broadcast %cst_44 : f32 to vector<1x256x8xf32>
      %97 = arith.maximumf %95, %96 : vector<1x256x8xf32>
      %c0_45 = arith.constant 0 : index
      %c0_46 = arith.constant 0 : index
      %c0_47 = arith.constant 0 : index
      %98 = vector.load %arg8[%c0_45, %c0_46, %c0_47] : memref<1x256x8xf32, #tpu.memory_space<vmem>>, vector<1x256x8xf32>
      tpu.vector_store %arg8[%c0_45, %c0_46, %c0_47], %97 {strides = array<i32>} : memref<1x256x8xf32, #tpu.memory_space<vmem>>, vector<1x256x8xf32>,
    } else {
    }
    return
  }
  func.func @transform_0(%arg0: i32, %arg1: i32) -> (i32, i32, i32, i32) {
    %c0_i32 = arith.constant 0 : i32
    %c0_i32_0 = arith.constant 0 : i32
    %c0_i32_1 = arith.constant 0 : i32
    return %arg0, %arg1, %c0_i32, %c0_i32_0 : i32, i32, i32, i32
  }
  func.func @transform_1(%arg0: i32, %arg1: i32) -> (i32, i32, i32, i32) {
    %c0_i32 = arith.constant 0 : i32
    %c0_i32_0 = arith.constant 0 : i32
    %c0_i32_1 = arith.constant 0 : i32
    return %arg0, %arg1, %c0_i32, %c0_i32_0 : i32, i32, i32, i32
  }
  func.func @transform_2(%arg0: i32, %arg1: i32) -> (i32, i32) {
    %c0_i32 = arith.constant 0 : i32
    %c0_i32_0 = arith.constant 0 : i32
    %c0_i32_1 = arith.constant 0 : i32
    return %c0_i32, %c0_i32_0 : i32, i32
  }
  func.func @transform_3(%arg0: i32, %arg1: i32) -> (i32, i32) {
    %c0_i32 = arith.constant 0 : i32
    %c0_i32_0 = arith.constant 0 : i32
    %c0_i32_1 = arith.constant 0 : i32
    return %c0_i32, %c0_i32_0 : i32, i32
  }
  func.func @transform_4(%arg0: i32, %arg1: i32) -> (i32, i32) {
    %c0_i32 = arith.constant 0 : i32
    %c0_i32_0 = arith.constant 0 : i32
    %c0_i32_1 = arith.constant 0 : i32
    return %c0_i32, %c0_i32_0 : i32, i32
  }
  func.func @transform_5(%arg0: i32, %arg1: i32) -> (i32, i32) {
    %c0_i32 = arith.constant 0 : i32
    %c0_i32_0 = arith.constant 0 : i32
    %c0_i32_1 = arith.constant 0 : i32
    return %c0_i32, %c0_i32_0 : i32, i32
  }
  func.func @transform_6(%arg0: i32, %arg1: i32) -> (i32, i32, i32) {
    %c0_i32 = arith.constant 0 : i32
    %c0_i32_0 = arith.constant 0 : i32
    %c0_i32_1 = arith.constant 0 : i32
    return %arg0, %c0_i32, %c0_i32_0 : i32, i32, i32
  }
}

</mosaic_0001>

<llo_original>
// kernel: tpu_custom_call.1
$region0: #{tpu_custom_call.1}
  #allocation0 [shape = 'u32[]', space=smem, size = 0x4, offset = 0x4, fixed_abs, tag = 'smem constant byte address 0x4 - core index']
  #allocation1 [shape = 'u32[144,128]{1,0:T(1,128)}', space=vmem, size = 0x12000, scoped, tag = 'internal scratch']
  #allocation2 [shape = 'f32[1,8]{1,0:T(1,128)}', space=vmem, size = 0x200, scoped, tag = 'scratch operand']
  #allocation3 [shape = 'f32[1,8]{1,0:T(1,128)}', space=vmem, size = 0x200, scoped, tag = 'scratch operand']
  %s0 = inlined_call_operand.hbm [shape: bf16[2,16,16,4], index: 0, kind: input, shape index: {}]
  %s1 = inlined_call_operand.hbm [shape: bf16[2,2,16,4], index: 1, kind: input, shape index: {}]
  %s2 = inlined_call_operand.hbm [shape: bf16[4,8], index: 2, kind: input, shape index: {}]
  %s3 = inlined_call_operand.hbm [shape: bf16[4,4], index: 3, kind: input, shape index: {}]
  %s4 = inlined_call_operand.hbm [shape: bf16[4,4], index: 4, kind: input, shape index: {}]
  %s5 = inlined_call_operand.hbm [shape: bf16[4,2], index: 5, kind: input, shape index: {}]
  %s6 = inlined_call_operand.hbm [shape: f32[2,256,8], index: 6, kind: output, shape index: {}]
  %s7 = sld [smem:[#allocation0]]
  $region89: #{tpu_custom_call.1} parent=0
    _
  %s9 = ssub.s32 1, %s7
  %s10 = scalar_select 0, %s9, %s7
  $region1: #{tpu_custom_call.1} parent=0
    #allocation4 [shape = 'u8[65536]{0}', space=vmem, size = 0x10000, scoped, tag = 'input window, operand 0']
    #allocation5 [shape = 's32[2]{0}', space=sflag, size = 0x8, scoped, tag = 'scoped memory for tpu_custom_call.1']
    #allocation6 [shape = 's32[2]{0}', space=sflag, size = 0x8, scoped, tag = 'scoped memory for tpu_custom_call.1']
    #allocation7 [shape = 'u8[8192]{0}', space=vmem, size = 0x2000, scoped, tag = 'input window, operand 1']
    #allocation8 [shape = 's32[2]{0}', space=sflag, size = 0x8, scoped, tag = 'scoped memory for tpu_custom_call.1']
    #allocation9 [shape = 'u8[1024]{0}', space=vmem, size = 0x400, scoped, tag = 'input window, operand 2, single buffered']
    #allocation10 [shape = 'u8[1024]{0}', space=vmem, size = 0x400, scoped, tag = 'input window, operand 3, single buffered']
    #allocation11 [shape = 's32[1]{0}', space=sflag, size = 0x4, scoped, tag = 'scoped memory for tpu_custom_call.1']
    #allocation12 [shape = 'u8[1024]{0}', space=vmem, size = 0x400, scoped, tag = 'input window, operand 4, single buffered']
    #allocation13 [shape = 'u8[1024]{0}', space=vmem, size = 0x400, scoped, tag = 'input window, operand 5, single buffered']
    #allocation14 [shape = 's32[1]{0}', space=sflag, size = 0x4, scoped, tag = 'scoped memory for tpu_custom_call.1']
    #allocation15 [shape = 'u8[262144]{0}', space=vmem, size = 0x40000, scoped, tag = 'output window, operand 0']
    %11 = vsyncpa [#allocation5], 0
    %s12 = scalar_lea.sflag [#allocation5], 1
    %13 = vsyncpa %s12, 0
    %14 = vsyncpa [#allocation8], 0
    %s15 = scalar_lea.sflag [#allocation8], 1
    %16 = vsyncpa %s15, 0
    %17 = vsyncpa [#allocation11], 0
    %18 = vsyncpa [#allocation14], 0
    %19 = vsyncpa [#allocation6], 0
    %s20 = scalar_lea.sflag [#allocation6], 1
    %21 = vsyncpa %s20, 0
    loop: start=0, step=1, limit=6
    $region2: #{tpu_custom_call.1} parent=1 // loop_pre_header
      _
    $region3: #{tpu_custom_call.1} parent=1 // loop_header
      %s23 = sphi 0, %s27
      %p24 = scmp.ge.s32.totalorder %s23, 6
      %s30 = sphi 0, %s42
      %s31 = sphi 0, %s38
      %s32 = sphi 0, %s30
      %s33 = sphi 0, %s31
      %s34 = sphi 0, %s32
      %s35 = sphi 0, %s33
      %s47 = sphi 0, %s49
      %s50 = sphi 0, %s47
      %s51 = sphi 0, %s50
      %s67 = sphi 0, %s51
      %s75 = sphi 0, %s77
      %s78 = sphi 0, %s75
      %s79 = sphi 0, %s78
      %s95 = sphi 0, %s79
      %s99 = sphi 0, %s99
      %s101 = sphi 0, %s99
      %s102 = sphi 0, %s101
      %s116 = sphi 0, %s102
      %s120 = sphi 0, %s120
      %s122 = sphi 0, %s120
      %s123 = sphi 0, %s122
      %s137 = sphi 0, %s123
      %s141 = sphi 0, %s141
      %s143 = sphi 0, %s141
      %s144 = sphi 0, %s143
      %s158 = sphi 0, %s144
      %s162 = sphi 0, %s162
      %s164 = sphi 0, %s162
      %s165 = sphi 0, %s164
      %s179 = sphi 0, %s165
      %s185 = sphi 0, %s187
      %s188 = sphi 0, %s185
      %s189 = sphi 0, %s188
      %s205 = sphi 0, %s189
    $region4: #{tpu_custom_call.1} parent=1 // loop_header_branch
      %26 = sbr.rel (%p24) target = $region8
    $region5: #{tpu_custom_call.1} parent=1 // loop_body
      %s28 = ssub.s32 %s23, 1
      %s29 = ssub.s32 %s23, 2
      %s36 = sadd.s32 1, %s31
      %p37 = scmp.ge.s32.totalorder %s36, 2
      %s38 = scalar_select %p37, 0, %s36
      %s39 = sadd.s32 1, %s30
      %s40 = scalar_select %p37, %s39, %s30
      %p41 = scmp.ge.s32.totalorder %s40, 2
      %s42 = scalar_select %p41, 0, %s40
      %s43 = ssub.s32 %s30, %s42
      %s44 = ssub.s32 %s31, %s38
      %s45 = sor.u32 %s43, %s44
      %p46 = scmp.eq.s32.totalorder %s45, 0
      %s48 = sadd.s32 %s47, 1
      %s49 = scalar_select %p46, %s47, %s48
      %p52 = pneg %p46
      %p53 = scmp.eq.s32.totalorder %s23, 3
      %p54 = por %p52, %p53
      %p55 = scmp.ne.s32.totalorder %s47, %s50
      %p56 = scmp.eq.s32.totalorder %s23, 0
      %p57 = por %p55, %p56
      %p58 = scmp.ne.s32.totalorder %s47, %s50
      %p59 = scmp.eq.s32.totalorder %s28, 3
      %p60 = por %p58, %p59
      %p61 = scmp.ne.s32.totalorder %s50, %s51
      %p62 = scmp.eq.s32.totalorder %s28, 0
      %p63 = por %p61, %p62
      %p64 = scmp.ne.s32.totalorder %s50, %s51
      %p65 = scmp.eq.s32.totalorder %s29, 3
      %p66 = por %p64, %p65
      %p68 = scmp.ne.s32.totalorder %s51, %s67
      %p69 = scmp.eq.s32.totalorder %s29, 0
      %p70 = por %p68, %p69
      %s71 = ssub.s32 %s30, %s42
      %s72 = ssub.s32 %s31, %s38
      %s73 = sor.u32 %s71, %s72
      %p74 = scmp.eq.s32.totalorder %s73, 0
      %s76 = sadd.s32 %s75, 1
      %s77 = scalar_select %p74, %s75, %s76
      %p80 = pneg %p74
      %p81 = scmp.eq.s32.totalorder %s23, 3
      %p82 = por %p80, %p81
      %p83 = scmp.ne.s32.totalorder %s75, %s78
      %p84 = scmp.eq.s32.totalorder %s23, 0
      %p85 = por %p83, %p84
      %p86 = scmp.ne.s32.totalorder %s75, %s78
      %p87 = scmp.eq.s32.totalorder %s28, 3
      %p88 = por %p86, %p87
      %p89 = scmp.ne.s32.totalorder %s78, %s79
      %p90 = scmp.eq.s32.totalorder %s28, 0
      %p91 = por %p89, %p90
      %p92 = scmp.ne.s32.totalorder %s78, %s79
      %p93 = scmp.eq.s32.totalorder %s29, 3
      %p94 = por %p92, %p93
      %p96 = scmp.ne.s32.totalorder %s79, %s95
      %p97 = scmp.eq.s32.totalorder %s29, 0
      %p98 = por %p96, %p97
      %s100 = sadd.s32 %s99, 1
      %p103 = scmp.eq.s32.totalorder %s23, 3
      %p104 = scmp.ne.s32.totalorder %s99, %s101
      %p105 = scmp.eq.s32.totalorder %s23, 0
      %p106 = por %p104, %p105
      %p107 = scmp.ne.s32.totalorder %s99, %s101
      %p108 = scmp.eq.s32.totalorder %s28, 3
      %p109 = por %p107, %p108
      %p110 = scmp.ne.s32.totalorder %s101, %s102
      %p111 = scmp.eq.s32.totalorder %s28, 0
      %p112 = por %p110, %p111
      %p113 = scmp.ne.s32.totalorder %s101, %s102
      %p114 = scmp.eq.s32.totalorder %s29, 3
      %p115 = por %p113, %p114
      %p117 = scmp.ne.s32.totalorder %s102, %s116
      %p118 = scmp.eq.s32.totalorder %s29, 0
      %p119 = por %p117, %p118
      %s121 = sadd.s32 %s120, 1
      %p124 = scmp.eq.s32.totalorder %s23, 3
      %p125 = scmp.ne.s32.totalorder %s120, %s122
      %p126 = scmp.eq.s32.totalorder %s23, 0
      %p127 = por %p125, %p126
      %p128 = scmp.ne.s32.totalorder %s120, %s122
      %p129 = scmp.eq.s32.totalorder %s28, 3
      %p130 = por %p128, %p129
      %p131 = scmp.ne.s32.totalorder %s122, %s123
      %p132 = scmp.eq.s32.totalorder %s28, 0
      %p133 = por %p131, %p132
      %p134 = scmp.ne.s32.totalorder %s122, %s123
      %p135 = scmp.eq.s32.totalorder %s29, 3
      %p136 = por %p134, %p135
      %p138 = scmp.ne.s32.totalorder %s123, %s137
      %p139 = scmp.eq.s32.totalorder %s29, 0
      %p140 = por %p138, %p139
      %s142 = sadd.s32 %s141, 1
      %p145 = scmp.eq.s32.totalorder %s23, 3
      %p146 = scmp.ne.s32.totalorder %s141, %s143
      %p147 = scmp.eq.s32.totalorder %s23, 0
      %p148 = por %p146, %p147
      %p149 = scmp.ne.s32.totalorder %s141, %s143
      %p150 = scmp.eq.s32.totalorder %s28, 3
      %p151 = por %p149, %p150
      %p152 = scmp.ne.s32.totalorder %s143, %s144
      %p153 = scmp.eq.s32.totalorder %s28, 0
      %p154 = por %p152, %p153
      %p155 = scmp.ne.s32.totalorder %s143, %s144
      %p156 = scmp.eq.s32.totalorder %s29, 3
      %p157 = por %p155, %p156
      %p159 = scmp.ne.s32.totalorder %s144, %s158
      %p160 = scmp.eq.s32.totalorder %s29, 0
      %p161 = por %p159, %p160
      %s163 = sadd.s32 %s162, 1
      %p166 = scmp.eq.s32.totalorder %s23, 3
      %p167 = scmp.ne.s32.totalorder %s162, %s164
      %p168 = scmp.eq.s32.totalorder %s23, 0
      %p169 = por %p167, %p168
      %p170 = scmp.ne.s32.totalorder %s162, %s164
      %p171 = scmp.eq.s32.totalorder %s28, 3
      %p172 = por %p170, %p171
      %p173 = scmp.ne.s32.totalorder %s164, %s165
      %p174 = scmp.eq.s32.totalorder %s28, 0
      %p175 = por %p173, %p174
      %p176 = scmp.ne.s32.totalorder %s164, %s165
      %p177 = scmp.eq.s32.totalorder %s29, 3
      %p178 = por %p176, %p177
      %p180 = scmp.ne.s32.totalorder %s165, %s179
      %p181 = scmp.eq.s32.totalorder %s29, 0
      %p182 = por %p180, %p181
      %s183 = ssub.s32 %s30, %s42
      %p184 = scmp.eq.s32.totalorder %s183, 0
      %s186 = sadd.s32 %s185, 1
      %s187 = scalar_select %p184, %s185, %s186
      %p190 = pneg %p184
      %p191 = scmp.eq.s32.totalorder %s23, 3
      %p192 = por %p190, %p191
      %p193 = scmp.ne.s32.totalorder %s185, %s188
      %p194 = scmp.eq.s32.totalorder %s23, 0
      %p195 = por %p193, %p194
      %p196 = scmp.ne.s32.totalorder %s185, %s188
      %p197 = scmp.eq.s32.totalorder %s28, 3
      %p198 = por %p196, %p197
      %p199 = scmp.ne.s32.totalorder %s188, %s189
      %p200 = scmp.eq.s32.totalorder %s28, 0
      %p201 = por %p199, %p200
      %p202 = scmp.ne.s32.totalorder %s188, %s189
      %p203 = scmp.eq.s32.totalorder %s29, 3
      %p204 = por %p202, %p203
      %p206 = scmp.ne.s32.totalorder %s189, %s205
      %p207 = scmp.eq.s32.totalorder %s29, 0
      %p208 = por %p206, %p207
      %p209 = scmp.le.s32.totalorder 1, %s23
      %p210 = scmp.lt.s32.totalorder %s23, 5
      %p211 = pnand %p209, %p210
      %p212 = pneg %p211
      // Predicated region
      $region9: #{tpu_custom_call.1} parent=5 // pred_check
        _
      $region10: #{tpu_custom_call.1} parent=5 // pred_check_branch
        %214 = sbr.rel (%p211) target = $region12
      $region11: #{tpu_custom_call.1} parent=5 // pred_region
        %s215 = ssub.s32 %s23, 1
        // Predicated region
        $region13: #{tpu_custom_call.1} parent=11 // pred_check
          %p216 = pneg %p112
        $region14: #{tpu_custom_call.1} parent=11 // pred_check_branch
          %218 = sbr.rel (%p216) target = $region16
        $region15: #{tpu_custom_call.1} parent=11 // pred_region
          %s220 = ssub.s32 32, 32
          %221 = vsyncadd [#allocation8], %s220
          %s223 = sshll.u32 [#allocation9], 4
          %s224 = int_to_ptr.vmem [resolvable:$true] %s223
          %226 = dma.hbm_to_vmem [thread:$0]  %s2, 32, %s224, [#allocation8]
        $region16: #{tpu_custom_call.1} parent=11 // pred_fallthru
          _
        // Predicated region
        $region17: #{tpu_custom_call.1} parent=11 // pred_check
          %p227 = pneg %p133
        $region18: #{tpu_custom_call.1} parent=11 // pred_check_branch
          %229 = sbr.rel (%p227) target = $region20
        $region19: #{tpu_custom_call.1} parent=11 // pred_region
          %s231 = ssub.s32 32, 32
          %232 = vsyncadd [#allocation11], %s231
          %s234 = sshll.u32 [#allocation10], 4
          %s235 = int_to_ptr.vmem [resolvable:$true] %s234
          %237 = dma.hbm_to_vmem [thread:$0]  %s3, 32, %s235, [#allocation11]
        $region20: #{tpu_custom_call.1} parent=11 // pred_fallthru
          _
        // Predicated region
        $region21: #{tpu_custom_call.1} parent=11 // pred_check
          %p238 = pneg %p154
        $region22: #{tpu_custom_call.1} parent=11 // pred_check_branch
          %240 = sbr.rel (%p238) target = $region24
        $region23: #{tpu_custom_call.1} parent=11 // pred_region
          %s242 = ssub.s32 32, 32
          %243 = vsyncadd [#allocation11], %s242
          %s245 = sshll.u32 [#allocation12], 4
          %s246 = int_to_ptr.vmem [resolvable:$true] %s245
          %248 = dma.hbm_to_vmem [thread:$0]  %s4, 32, %s246, [#allocation11]
        $region24: #{tpu_custom_call.1} parent=11 // pred_fallthru
          _
        // Predicated region
        $region25: #{tpu_custom_call.1} parent=11 // pred_check
          %p249 = pneg %p175
        $region26: #{tpu_custom_call.1} parent=11 // pred_check_branch
          %251 = sbr.rel (%p249) target = $region28
        $region27: #{tpu_custom_call.1} parent=11 // pred_region
          %s253 = ssub.s32 32, 32
          %254 = vsyncadd [#allocation14], %s253
          %s256 = sshll.u32 [#allocation13], 4
          %s257 = int_to_ptr.vmem [resolvable:$true] %s256
          %259 = dma.hbm_to_vmem [thread:$0]  %s5, 32, %s257, [#allocation14]
        $region28: #{tpu_custom_call.1} parent=11 // pred_fallthru
          _
      $region12: #{tpu_custom_call.1} parent=5 // pred_fallthru
        _
      %p260 = scmp.lt.s32.totalorder %s23, 4
      // Predicated region
      $region29: #{tpu_custom_call.1} parent=5 // pred_check
        %p261 = pneg %p260
      $region30: #{tpu_custom_call.1} parent=5 // pred_check_branch
        %263 = sbr.rel (%p261) target = $region32
      $region31: #{tpu_custom_call.1} parent=5 // pred_region
        // Predicated region
        $region33: #{tpu_custom_call.1} parent=31 // pred_check
          %p264 = pneg %p57
        $region34: #{tpu_custom_call.1} parent=31 // pred_check_branch
          %266 = sbr.rel (%p264) target = $region36
        $region35: #{tpu_custom_call.1} parent=31 // pred_region
          %s267 = sand.u32 %s47, 1
          %s268 = scalar_lea.sflag [#allocation5], %s267
          %s269 = sand.u32 %s47, 1
          %s270 = smul.addr %s269, 64
          %s271 = scalar_lea.vmem [#allocation4], %s270
          %s272 = smul.u32 8, %s31
          %s274 = ssub.s32 1024, 1024
          %275 = vsyncadd %s268, %s274
          %s276 = smul.addr %s272, 2
          %s277 = smul.addr %s30, 32
          %s278 = sadd.s32 %s276, %s277
          %s279 = smul.addr %s278, 64
          %s280 = scalar_lea.hbm %s0, %s279
          %s281 = sshll.u32 %s271, 4
          %s282 = int_to_ptr.vmem [resolvable:$true] %s281
          %287 = dma.hbm_to_vmem [thread:$0]  %s280, 1024, %s282, %s268, 64, 64, 4
        $region36: #{tpu_custom_call.1} parent=31 // pred_fallthru
          _
        // Predicated region
        $region37: #{tpu_custom_call.1} parent=31 // pred_check
          %p288 = pneg %p85
        $region38: #{tpu_custom_call.1} parent=31 // pred_check_branch
          %290 = sbr.rel (%p288) target = $region40
        $region39: #{tpu_custom_call.1} parent=31 // pred_region
          %s291 = sand.u32 %s23, 1
          %s292 = scalar_lea.sflag [#allocation8], %s291
          %s293 = sand.u32 %s75, 1
          %s294 = smul.addr %s293, 8
          %s295 = scalar_lea.vmem [#allocation7], %s294
          %s297 = ssub.s32 128, 128
          %298 = vsyncadd %s292, %s297
          %s299 = smul.addr %s31, 2
          %s300 = smul.addr %s30, 4
          %s301 = sadd.s32 %s299, %s300
          %s302 = smul.addr %s301, 64
          %s303 = scalar_lea.hbm %s1, %s302
          %s304 = sshll.u32 %s295, 4
          %s305 = int_to_ptr.vmem [resolvable:$true] %s304
          %310 = dma.hbm_to_vmem [thread:$0]  %s303, 128, %s305, %s292, 64, 64, 4
        $region40: #{tpu_custom_call.1} parent=31 // pred_fallthru
          _
      $region32: #{tpu_custom_call.1} parent=5 // pred_fallthru
        _
      %p311 = scmp.le.s32.totalorder 1, %s23
      %p312 = scmp.lt.s32.totalorder %s23, 5
      %p313 = pnand %p311, %p312
      %p314 = pneg %p313
      // Predicated region
      $region41: #{tpu_custom_call.1} parent=5 // pred_check
        _
      $region42: #{tpu_custom_call.1} parent=5 // pred_check_branch
        %316 = sbr.rel (%p313) target = $region44
      $region43: #{tpu_custom_call.1} parent=5 // pred_region
        %s317 = ssub.s32 %s23, 1
        %s318 = sand.u32 %s50, 1
        %s319 = scalar_lea.sflag [#allocation5], %s318
        %s320 = sand.u32 %s50, 1
        %s321 = smul.addr %s320, 64
        %s322 = scalar_lea.vmem [#allocation4], %s321
        // Predicated region
        $region45: #{tpu_custom_call.1} parent=43 // pred_check
          %p323 = pneg %p63
        $region46: #{tpu_custom_call.1} parent=43 // pred_check_branch
          %325 = sbr.rel (%p323) target = $region48
        $region47: #{tpu_custom_call.1} parent=43 // pred_region
          %326 = dma.done %s319, 1024
        $region48: #{tpu_custom_call.1} parent=43 // pred_fallthru
          _
        %s327 = sand.u32 %s28, 1
        %s328 = scalar_lea.sflag [#allocation8], %s327
        %s329 = sand.u32 %s78, 1
        %s330 = smul.addr %s329, 8
        %s331 = scalar_lea.vmem [#allocation7], %s330
        // Predicated region
        $region49: #{tpu_custom_call.1} parent=43 // pred_check
          %p332 = pneg %p91
        $region50: #{tpu_custom_call.1} parent=43 // pred_check_branch
          %334 = sbr.rel (%p332) target = $region52
        $region51: #{tpu_custom_call.1} parent=43 // pred_region
          %335 = dma.done %s328, 128
        $region52: #{tpu_custom_call.1} parent=43 // pred_fallthru
          _
        // Predicated region
        $region53: #{tpu_custom_call.1} parent=43 // pred_check
          %p336 = pneg %p112
        $region54: #{tpu_custom_call.1} parent=43 // pred_check_branch
          %338 = sbr.rel (%p336) target = $region56
        $region55: #{tpu_custom_call.1} parent=43 // pred_region
          %339 = dma.done [#allocation8], 32
        $region56: #{tpu_custom_call.1} parent=43 // pred_fallthru
          _
        // Predicated region
        $region57: #{tpu_custom_call.1} parent=43 // pred_check
          %p340 = pneg %p133
        $region58: #{tpu_custom_call.1} parent=43 // pred_check_branch
          %342 = sbr.rel (%p340) target = $region60
        $region59: #{tpu_custom_call.1} parent=43 // pred_region
          %343 = dma.done [#allocation11], 32
        $region60: #{tpu_custom_call.1} parent=43 // pred_fallthru
          _
        // Predicated region
        $region61: #{tpu_custom_call.1} parent=43 // pred_check
          %p344 = pneg %p154
        $region62: #{tpu_custom_call.1} parent=43 // pred_check_branch
          %346 = sbr.rel (%p344) target = $region64
        $region63: #{tpu_custom_call.1} parent=43 // pred_region
          %347 = dma.done [#allocation11], 32
        $region64: #{tpu_custom_call.1} parent=43 // pred_fallthru
          _
        // Predicated region
        $region65: #{tpu_custom_call.1} parent=43 // pred_check
          %p348 = pneg %p175
        $region66: #{tpu_custom_call.1} parent=43 // pred_check_branch
          %350 = sbr.rel (%p348) target = $region68
        $region67: #{tpu_custom_call.1} parent=43 // pred_region
          %351 = dma.done [#allocation14], 32
        $region68: #{tpu_custom_call.1} parent=43 // pred_fallthru
          _
        %s352 = sand.u32 %s50, 1
        %s353 = scalar_lea.sflag [#allocation5], %s352
        %s354 = sand.u32 %s50, 1
        %s355 = smul.addr %s354, 64
        %s356 = scalar_lea.vmem [#allocation4], %s355
        %p357 = pneg %p63
        %p358 = pneg %p60
        %s359 = sand.u32 %s28, 1
        %s360 = scalar_lea.sflag [#allocation8], %s359
        %s361 = sand.u32 %s78, 1
        %s362 = smul.addr %s361, 8
        %s363 = scalar_lea.vmem [#allocation7], %s362
        %p364 = pneg %p91
        %p365 = pneg %p88
        %p366 = pneg %p112
        %p367 = pneg %p109
        %p368 = pneg %p133
        %p369 = pneg %p130
        %p370 = pneg %p154
        %p371 = pneg %p151
        %p372 = pneg %p175
        %p373 = pneg %p172
        %p374 = pneg %p201
        %p375 = pneg %p198
        %s376 = sand.u32 %s188, 1
        %s377 = scalar_lea.sflag [#allocation6], %s376
        %s378 = sand.u32 %s188, 1
        %s379 = smul.addr %s378, 256
        %s380 = scalar_lea.vmem [#allocation15], %s379
        %s381 = smul.u32 8, %s33
        %v383 = vld [vmem:[%s322] sm:$0xf]
        %v384 = vld [vmem:[%s322 + $0x4] sm:$0xf]
        %v385 = vld [vmem:[%s322 + $0x8] sm:$0xf]
        %v386 = vld [vmem:[%s322 + $0xc] sm:$0xf]
        %v387 = vld [vmem:[%s322 + $0x10] sm:$0xf]
        %v388 = vld [vmem:[%s322 + $0x14] sm:$0xf]
        %v389 = vld [vmem:[%s322 + $0x18] sm:$0xf]
        %v390 = vld [vmem:[%s322 + $0x1c] sm:$0xf]
        %v391 = vld [vmem:[%s322 + $0x20] sm:$0xf]
        %v392 = vld [vmem:[%s322 + $0x24] sm:$0xf]
        %v393 = vld [vmem:[%s322 + $0x28] sm:$0xf]
        %v394 = vld [vmem:[%s322 + $0x2c] sm:$0xf]
        %v395 = vld [vmem:[%s322 + $0x30] sm:$0xf]
        %v396 = vld [vmem:[%s322 + $0x34] sm:$0xf]
        %v397 = vld [vmem:[%s322 + $0x38] sm:$0xf]
        %v398 = vld [vmem:[%s322 + $0x3c] sm:$0xf]
        %v399 = vld [vmem:[%s331] sm:$0xf]
        %v400 = vld [vmem:[%s331 + $0x4] sm:$0xf]
        %v419 = vunpack.c.l.b16 %v383
        %v420 = vunpack.c.l.b16 %v384
        %v421 = vunpack.c.l.b16 %v385
        %v422 = vunpack.c.l.b16 %v386
        %v423 = vunpack.c.l.b16 %v387
        %v424 = vunpack.c.l.b16 %v388
        %v425 = vunpack.c.l.b16 %v389
        %v426 = vunpack.c.l.b16 %v390
        %v427 = vunpack.c.l.b16 %v391
        %v428 = vunpack.c.l.b16 %v392
        %v429 = vunpack.c.l.b16 %v393
        %v430 = vunpack.c.l.b16 %v394
        %v431 = vunpack.c.l.b16 %v395
        %v432 = vunpack.c.l.b16 %v396
        %v433 = vunpack.c.l.b16 %v397
        %v434 = vunpack.c.l.b16 %v398
        %v435 = vunpack.c.l.b16 %v399
        %v436 = vunpack.c.l.b16 %v400
        %v437 = vpack.c.b16 %v420, %v419
        %v438 = vpack.c.b16 %v422, %v421
        %v439 = vpack.c.b16 %v424, %v423
        %v440 = vpack.c.b16 %v426, %v425
        %v441 = vpack.c.b16 %v428, %v427
        %v442 = vpack.c.b16 %v430, %v429
        %v443 = vpack.c.b16 %v432, %v431
        %v444 = vpack.c.b16 %v434, %v433
        %v445 = vpack.c.b16 %v436, %v435
        %v447 = vshrl.u32 %v437, 16
        %v449 = vshll.u32 %v437, 16
        %v451 = vrot.slane %v449, 1
        %v452 = vor.u32 %v447, %v451
        %v454 = vshrl.u32 %v438, 16
        %v456 = vshll.u32 %v438, 16
        %v458 = vrot.slane %v456, 1
        %v459 = vor.u32 %v454, %v458
        %v461 = vshrl.u32 %v439, 16
        %v463 = vshll.u32 %v439, 16
        %v465 = vrot.slane %v463, 1
        %v466 = vor.u32 %v461, %v465
        %v468 = vshrl.u32 %v440, 16
        %v470 = vshll.u32 %v440, 16
        %v472 = vrot.slane %v470, 1
        %v473 = vor.u32 %v468, %v472
        %v475 = vshrl.u32 %v441, 16
        %v477 = vshll.u32 %v441, 16
        %v479 = vrot.slane %v477, 1
        %v480 = vor.u32 %v475, %v479
        %v482 = vshrl.u32 %v442, 16
        %v484 = vshll.u32 %v442, 16
        %v486 = vrot.slane %v484, 1
        %v487 = vor.u32 %v482, %v486
        %v489 = vshrl.u32 %v443, 16
        %v491 = vshll.u32 %v443, 16
        %v493 = vrot.slane %v491, 1
        %v494 = vor.u32 %v489, %v493
        %v496 = vshrl.u32 %v444, 16
        %v498 = vshll.u32 %v444, 16
        %v500 = vrot.slane %v498, 1
        %v501 = vor.u32 %v496, %v500
        %v503 = vshrl.u32 %v445, 16
        %v505 = vshll.u32 %v445, 16
        %v507 = vrot.slane %v505, 1
        %v508 = vor.u32 %v503, %v507
        %vm518 = vcmask 1047552
        %vm519 = vsmask.f32 7424
        %vm520 = vmand %vm518, %vm519
        %v521 = vsel %vm520, %v452, 0
        %v522 = vsel %vm520, %v459, 0
        %v523 = vsel %vm520, %v466, 0
        %v524 = vsel %vm520, %v473, 0
        %v525 = vsel %vm520, %v480, 0
        %v526 = vsel %vm520, %v487, 0
        %v527 = vsel %vm520, %v494, 0
        %v528 = vsel %vm520, %v501, 0
        %v529 = vsel %vm520, %v508, 0
        %v530 = vld [vmem:[#allocation9] sm:$0x3]
        %vm531 = vcmask 31744
        %v532 = vsel %vm531, %v437, 0
        %v534 = vsel %vm531, %v438, 0
        %v536 = vsel %vm531, %v439, 0
        %v538 = vsel %vm531, %v440, 0
        %v540 = vsel %vm531, %v441, 0
        %v542 = vsel %vm531, %v442, 0
        %v544 = vsel %vm531, %v443, 0
        %v546 = vsel %vm531, %v444, 0
        %vm548 = vcmask 1041408
        %v550 = vsel %vm548, %v530, 0
        %552 = vmatprep.subr.bf16.mxu0 0
        %553 = vmatpush1.bf16.msra.mxu0 %v550
        %554 = vmatprep.subr.bf16.mxu0 0
        %555 = vmatpush1.bf16.msra.mxu0 0
        %556 = vmatprep.subr.bf16.mxu0 0
        %557 = vmatpush1.bf16.msra.mxu0 0
        %558 = vmatprep.subr.bf16.mxu0 0
        %559 = vmatpush1.bf16.msra.mxu0 0
        %560 = vmatprep.subr.bf16.mxu0 0
        %561 = vmatpush1.bf16.msra.mxu0 0
        %562 = vmatprep.subr.bf16.mxu0 0
        %563 = vmatpush1.bf16.msra.mxu0 0
        %564 = vmatprep.subr.bf16.mxu0 0
        %565 = vmatpush1.bf16.msra.mxu0 0
        %566 = vmatprep.subr.bf16.mxu0 0
        %567 = vmatpush1.bf16.msra.mxu0 0
        %568 = vmatprep.subr.bf16.mxu0 0
        %569 = vmatpush1.bf16.msra.mxu0 0
        %570 = vmatprep.subr.bf16.mxu0 0
        %571 = vmatpush1.bf16.msra.mxu0 0
        %572 = vmatprep.subr.bf16.mxu0 0
        %573 = vmatpush1.bf16.msra.mxu0 0
        %574 = vmatprep.subr.bf16.mxu0 0
        %575 = vmatpush1.bf16.msra.mxu0 0
        %576 = vmatprep.subr.bf16.mxu0 0
        %577 = vmatpush1.bf16.msra.mxu0 0
        %578 = vmatprep.subr.bf16.mxu0 0
        %579 = vmatpush1.bf16.msra.mxu0 0
        %580 = vmatprep.subr.bf16.mxu0 0
        %581 = vmatpush1.bf16.msra.mxu0 0
        %582 = vmatprep.subr.bf16.mxu0 0
        %583 = vmatpush1.bf16.msra.mxu0 0
        %584 = vmatprep.mubr.bf16.mxu0 0
        %585 = vmatmul.mubr.bf16.gmra.mrb[0].mxu0 %v532
        %v586 = vpop.f32.mrb[0].mxu0
        %v587 = vadd.f32 0.0, %v586
        %v588 = vpop.f32.mrb[0].mxu0
        %v589 = vpop.f32.mrb[0].mxu0
        %v590 = vadd.f32 0.0, %v589
        %v591 = vpop.f32.mrb[0].mxu0
        %592 = vmatprep.mubr.bf16.mxu0 0
        %593 = vmatmul.mubr.bf16.gmra.mrb[0].mxu0 %v534
        %v594 = vpop.f32.mrb[0].mxu0
        %v595 = vadd.f32 0.0, %v594
        %v596 = vpop.f32.mrb[0].mxu0
        %v597 = vpop.f32.mrb[0].mxu0
        %v598 = vadd.f32 0.0, %v597
        %v599 = vpop.f32.mrb[0].mxu0
        %600 = vmatprep.mubr.bf16.mxu0 0
        %601 = vmatmul.mubr.bf16.gmra.mrb[0].mxu0 %v536
        %v602 = vpop.f32.mrb[0].mxu0
        %v603 = vadd.f32 0.0, %v602
        %v604 = vpop.f32.mrb[0].mxu0
        %v605 = vpop.f32.mrb[0].mxu0
        %v606 = vadd.f32 0.0, %v605
        %v607 = vpop.f32.mrb[0].mxu0
        %608 = vmatprep.mubr.bf16.mxu0 0
        %609 = vmatmul.mubr.bf16.gmra.mrb[0].mxu0 %v538
        %v610 = vpop.f32.mrb[0].mxu0
        %v611 = vadd.f32 0.0, %v610
        %v612 = vpop.f32.mrb[0].mxu0
        %v613 = vpop.f32.mrb[0].mxu0
        %v614 = vadd.f32 0.0, %v613
        %v615 = vpop.f32.mrb[0].mxu0
        %616 = vmatprep.mubr.bf16.mxu0 0
        %617 = vmatmul.mubr.bf16.gmra.mrb[0].mxu0 %v540
        %v618 = vpop.f32.mrb[0].mxu0
        %v619 = vadd.f32 0.0, %v618
        %v620 = vpop.f32.mrb[0].mxu0
        %v621 = vpop.f32.mrb[0].mxu0
        %v622 = vadd.f32 0.0, %v621
        %v623 = vpop.f32.mrb[0].mxu0
        %624 = vmatprep.mubr.bf16.mxu0 0
        %625 = vmatmul.mubr.bf16.gmra.mrb[0].mxu0 %v542
        %v626 = vpop.f32.mrb[0].mxu0
        %v627 = vadd.f32 0.0, %v626
        %v628 = vpop.f32.mrb[0].mxu0
        %v629 = vpop.f32.mrb[0].mxu0
        %v630 = vadd.f32 0.0, %v629
        %v631 = vpop.f32.mrb[0].mxu0
        %632 = vmatprep.mubr.bf16.mxu0 0
        %633 = vmatmul.mubr.bf16.gmra.mrb[0].mxu0 %v544
        %v634 = vpop.f32.mrb[0].mxu0
        %v635 = vadd.f32 0.0, %v634
        %v636 = vpop.f32.mrb[0].mxu0
        %v637 = vpop.f32.mrb[0].mxu0
        %v638 = vadd.f32 0.0, %v637
        %v639 = vpop.f32.mrb[0].mxu0
        %640 = vmatprep.mubr.bf16.mxu0 0
        %641 = vmatmul.mubr.bf16.gmra.mrb[0].mxu0 %v546
        %v642 = vpop.f32.mrb[0].mxu0
        %v643 = vadd.f32 0.0, %v642
        %v644 = vpop.f32.mrb[0].mxu0
        %v645 = vpop.f32.mrb[0].mxu0
        %v646 = vadd.f32 0.0, %v645
        %v647 = vpop.f32.mrb[0].mxu0
        %648 = vdwg.mxu0
        %v649 = vld [vmem:[#allocation10] sm:$0x3]
        %v651 = vsel %vm531, %v521, 0
        %v654 = vsel %vm531, %v522, 0
        %v657 = vsel %vm531, %v523, 0
        %v660 = vsel %vm531, %v524, 0
        %v663 = vsel %vm531, %v525, 0
        %v666 = vsel %vm531, %v526, 0
        %v669 = vsel %vm531, %v527, 0
        %v672 = vsel %vm531, %v528, 0
        %v675 = vsel %vm548, %v649, 0
        %677 = vmatprep.subr.bf16.mxu0 0
        %678 = vmatpush1.bf16.msra.mxu0 %v675
        %679 = vmatprep.subr.bf16.mxu0 0
        %680 = vmatpush1.bf16.msra.mxu0 0
        %681 = vmatprep.subr.bf16.mxu0 0
        %682 = vmatpush1.bf16.msra.mxu0 0
        %683 = vmatprep.subr.bf16.mxu0 0
        %684 = vmatpush1.bf16.msra.mxu0 0
        %685 = vmatprep.subr.bf16.mxu0 0
        %686 = vmatpush1.bf16.msra.mxu0 0
        %687 = vmatprep.subr.bf16.mxu0 0
        %688 = vmatpush1.bf16.msra.mxu0 0
        %689 = vmatprep.subr.bf16.mxu0 0
        %690 = vmatpush1.bf16.msra.mxu0 0
        %691 = vmatprep.subr.bf16.mxu0 0
        %692 = vmatpush1.bf16.msra.mxu0 0
        %693 = vmatprep.subr.bf16.mxu0 0
        %694 = vmatpush1.bf16.msra.mxu0 0
        %695 = vmatprep.subr.bf16.mxu0 0
        %696 = vmatpush1.bf16.msra.mxu0 0
        %697 = vmatprep.subr.bf16.mxu0 0
        %698 = vmatpush1.bf16.msra.mxu0 0
        %699 = vmatprep.subr.bf16.mxu0 0
        %700 = vmatpush1.bf16.msra.mxu0 0
        %701 = vmatprep.subr.bf16.mxu0 0
        %702 = vmatpush1.bf16.msra.mxu0 0
        %703 = vmatprep.subr.bf16.mxu0 0
        %704 = vmatpush1.bf16.msra.mxu0 0
        %705 = vmatprep.subr.bf16.mxu0 0
        %706 = vmatpush1.bf16.msra.mxu0 0
        %707 = vmatprep.subr.bf16.mxu0 0
        %708 = vmatpush1.bf16.msra.mxu0 0
        %709 = vmatprep.mubr.bf16.mxu0 0
        %710 = vmatmul.mubr.bf16.gmra.mrb[0].mxu0 %v651
        %v711 = vpop.f32.mrb[0].mxu0
        %v712 = vadd.f32 0.0, %v711
        %v713 = vpop.f32.mrb[0].mxu0
        %v714 = vpop.f32.mrb[0].mxu0
        %v715 = vadd.f32 0.0, %v714
        %v716 = vpop.f32.mrb[0].mxu0
        %717 = vmatprep.mubr.bf16.mxu0 0
        %718 = vmatmul.mubr.bf16.gmra.mrb[0].mxu0 %v654
        %v719 = vpop.f32.mrb[0].mxu0
        %v720 = vadd.f32 0.0, %v719
        %v721 = vpop.f32.mrb[0].mxu0
        %v722 = vpop.f32.mrb[0].mxu0
        %v723 = vadd.f32 0.0, %v722
        %v724 = vpop.f32.mrb[0].mxu0
        %725 = vmatprep.mubr.bf16.mxu0 0
        %726 = vmatmul.mubr.bf16.gmra.mrb[0].mxu0 %v657
        %v727 = vpop.f32.mrb[0].mxu0
        %v728 = vadd.f32 0.0, %v727
        %v729 = vpop.f32.mrb[0].mxu0
        %v730 = vpop.f32.mrb[0].mxu0
        %v731 = vadd.f32 0.0, %v730
        %v732 = vpop.f32.mrb[0].mxu0
        %733 = vmatprep.mubr.bf16.mxu0 0
        %734 = vmatmul.mubr.bf16.gmra.mrb[0].mxu0 %v660
        %v735 = vpop.f32.mrb[0].mxu0
        %v736 = vadd.f32 0.0, %v735
        %v737 = vpop.f32.mrb[0].mxu0
        %v738 = vpop.f32.mrb[0].mxu0
        %v739 = vadd.f32 0.0, %v738
        %v740 = vpop.f32.mrb[0].mxu0
        %741 = vmatprep.mubr.bf16.mxu0 0
        %742 = vmatmul.mubr.bf16.gmra.mrb[0].mxu0 %v663
        %v743 = vpop.f32.mrb[0].mxu0
        %v744 = vadd.f32 0.0, %v743
        %v745 = vpop.f32.mrb[0].mxu0
        %v746 = vpop.f32.mrb[0].mxu0
        %v747 = vadd.f32 0.0, %v746
        %v748 = vpop.f32.mrb[0].mxu0
        %749 = vmatprep.mubr.bf16.mxu0 0
        %750 = vmatmul.mubr.bf16.gmra.mrb[0].mxu0 %v666
        %v751 = vpop.f32.mrb[0].mxu0
        %v752 = vadd.f32 0.0, %v751
        %v753 = vpop.f32.mrb[0].mxu0
        %v754 = vpop.f32.mrb[0].mxu0
        %v755 = vadd.f32 0.0, %v754
        %v756 = vpop.f32.mrb[0].mxu0
        %757 = vmatprep.mubr.bf16.mxu0 0
        %758 = vmatmul.mubr.bf16.gmra.mrb[0].mxu0 %v669
        %v759 = vpop.f32.mrb[0].mxu0
        %v760 = vadd.f32 0.0, %v759
        %v761 = vpop.f32.mrb[0].mxu0
        %v762 = vpop.f32.mrb[0].mxu0
        %v763 = vadd.f32 0.0, %v762
        %v764 = vpop.f32.mrb[0].mxu0
        %765 = vmatprep.mubr.bf16.mxu0 0
        %766 = vmatmul.mubr.bf16.gmra.mrb[0].mxu0 %v672
        %v767 = vpop.f32.mrb[0].mxu0
        %v768 = vadd.f32 0.0, %v767
        %v769 = vpop.f32.mrb[0].mxu0
        %v770 = vpop.f32.mrb[0].mxu0
        %v771 = vadd.f32 0.0, %v770
        %v772 = vpop.f32.mrb[0].mxu0
        %773 = vdwg.mxu0
        %v774 = vld [vmem:[#allocation12] sm:$0x3]
        %v775 = vsel %vm531, %v445, 0
        %v778 = vsel %vm548, %v774, 0
        %780 = vmatprep.subr.bf16.mxu0 0
        %781 = vmatpush1.bf16.msra.mxu0 %v778
        %782 = vmatprep.subr.bf16.mxu0 0
        %783 = vmatpush1.bf16.msra.mxu0 0
        %784 = vmatprep.subr.bf16.mxu0 0
        %785 = vmatpush1.bf16.msra.mxu0 0
        %786 = vmatprep.subr.bf16.mxu0 0
        %787 = vmatpush1.bf16.msra.mxu0 0
        %788 = vmatprep.subr.bf16.mxu0 0
        %789 = vmatpush1.bf16.msra.mxu0 0
        %790 = vmatprep.subr.bf16.mxu0 0
        %791 = vmatpush1.bf16.msra.mxu0 0
        %792 = vmatprep.subr.bf16.mxu0 0
        %793 = vmatpush1.bf16.msra.mxu0 0
        %794 = vmatprep.subr.bf16.mxu0 0
        %795 = vmatpush1.bf16.msra.mxu0 0
        %796 = vmatprep.subr.bf16.mxu0 0
        %797 = vmatpush1.bf16.msra.mxu0 0
        %798 = vmatprep.subr.bf16.mxu0 0
        %799 = vmatpush1.bf16.msra.mxu0 0
        %800 = vmatprep.subr.bf16.mxu0 0
        %801 = vmatpush1.bf16.msra.mxu0 0
        %802 = vmatprep.subr.bf16.mxu0 0
        %803 = vmatpush1.bf16.msra.mxu0 0
        %804 = vmatprep.subr.bf16.mxu0 0
        %805 = vmatpush1.bf16.msra.mxu0 0
        %806 = vmatprep.subr.bf16.mxu0 0
        %807 = vmatpush1.bf16.msra.mxu0 0
        %808 = vmatprep.subr.bf16.mxu0 0
        %809 = vmatpush1.bf16.msra.mxu0 0
        %810 = vmatprep.subr.bf16.mxu0 0
        %811 = vmatpush1.bf16.msra.mxu0 0
        %812 = vmatprep.mubr.bf16.mxu0 0
        %813 = vmatmul.mubr.bf16.gmra.mrb[0].mxu0 %v534
        %v814 = vpop.f32.mrb[0].mxu0
        %v815 = vadd.f32 0.0, %v814
        %v816 = vpop.f32.mrb[0].mxu0
        %v817 = vpop.f32.mrb[0].mxu0
        %v818 = vadd.f32 0.0, %v817
        %v819 = vpop.f32.mrb[0].mxu0
        %820 = vmatprep.mubr.bf16.mxu0 0
        %821 = vmatmul.mubr.bf16.gmra.mrb[0].mxu0 %v536
        %v822 = vpop.f32.mrb[0].mxu0
        %v823 = vadd.f32 0.0, %v822
        %v824 = vpop.f32.mrb[0].mxu0
        %v825 = vpop.f32.mrb[0].mxu0
        %v826 = vadd.f32 0.0, %v825
        %v827 = vpop.f32.mrb[0].mxu0
        %828 = vmatprep.mubr.bf16.mxu0 0
        %829 = vmatmul.mubr.bf16.gmra.mrb[0].mxu0 %v538
        %v830 = vpop.f32.mrb[0].mxu0
        %v831 = vadd.f32 0.0, %v830
        %v832 = vpop.f32.mrb[0].mxu0
        %v833 = vpop.f32.mrb[0].mxu0
        %v834 = vadd.f32 0.0, %v833
        %v835 = vpop.f32.mrb[0].mxu0
        %836 = vmatprep.mubr.bf16.mxu0 0
        %837 = vmatmul.mubr.bf16.gmra.mrb[0].mxu0 %v540
        %v838 = vpop.f32.mrb[0].mxu0
        %v839 = vadd.f32 0.0, %v838
        %v840 = vpop.f32.mrb[0].mxu0
        %v841 = vpop.f32.mrb[0].mxu0
        %v842 = vadd.f32 0.0, %v841
        %v843 = vpop.f32.mrb[0].mxu0
        %844 = vmatprep.mubr.bf16.mxu0 0
        %845 = vmatmul.mubr.bf16.gmra.mrb[0].mxu0 %v542
        %v846 = vpop.f32.mrb[0].mxu0
        %v847 = vadd.f32 0.0, %v846
        %v848 = vpop.f32.mrb[0].mxu0
        %v849 = vpop.f32.mrb[0].mxu0
        %v850 = vadd.f32 0.0, %v849
        %v851 = vpop.f32.mrb[0].mxu0
        %852 = vmatprep.mubr.bf16.mxu0 0
        %853 = vmatmul.mubr.bf16.gmra.mrb[0].mxu0 %v544
        %v854 = vpop.f32.mrb[0].mxu0
        %v855 = vadd.f32 0.0, %v854
        %v856 = vpop.f32.mrb[0].mxu0
        %v857 = vpop.f32.mrb[0].mxu0
        %v858 = vadd.f32 0.0, %v857
        %v859 = vpop.f32.mrb[0].mxu0
        %860 = vmatprep.mubr.bf16.mxu0 0
        %861 = vmatmul.mubr.bf16.gmra.mrb[0].mxu0 %v546
        %v862 = vpop.f32.mrb[0].mxu0
        %v863 = vadd.f32 0.0, %v862
        %v864 = vpop.f32.mrb[0].mxu0
        %v865 = vpop.f32.mrb[0].mxu0
        %v866 = vadd.f32 0.0, %v865
        %v867 = vpop.f32.mrb[0].mxu0
        %868 = vmatprep.mubr.bf16.mxu0 0
        %869 = vmatmul.mubr.bf16.gmra.mrb[0].mxu0 %v775
        %v870 = vpop.f32.mrb[0].mxu0
        %v871 = vadd.f32 0.0, %v870
        %v872 = vpop.f32.mrb[0].mxu0
        %v873 = vpop.f32.mrb[0].mxu0
        %v874 = vadd.f32 0.0, %v873
        %v875 = vpop.f32.mrb[0].mxu0
        %876 = vdwg.mxu0
        %v877 = vld [vmem:[#allocation13] sm:$0x3]
        %v879 = vsel %vm531, %v529, 0
        %v882 = vsel %vm548, %v877, 0
        %884 = vmatprep.subr.bf16.mxu0 0
        %885 = vmatpush1.bf16.msra.mxu0 %v882
        %886 = vmatprep.subr.bf16.mxu0 0
        %887 = vmatpush1.bf16.msra.mxu0 0
        %888 = vmatprep.subr.bf16.mxu0 0
        %889 = vmatpush1.bf16.msra.mxu0 0
        %890 = vmatprep.subr.bf16.mxu0 0
        %891 = vmatpush1.bf16.msra.mxu0 0
        %892 = vmatprep.subr.bf16.mxu0 0
        %893 = vmatpush1.bf16.msra.mxu0 0
        %894 = vmatprep.subr.bf16.mxu0 0
        %895 = vmatpush1.bf16.msra.mxu0 0
        %896 = vmatprep.subr.bf16.mxu0 0
        %897 = vmatpush1.bf16.msra.mxu0 0
        %898 = vmatprep.subr.bf16.mxu0 0
        %899 = vmatpush1.bf16.msra.mxu0 0
        %900 = vmatprep.subr.bf16.mxu0 0
        %901 = vmatpush1.bf16.msra.mxu0 0
        %902 = vmatprep.subr.bf16.mxu0 0
        %903 = vmatpush1.bf16.msra.mxu0 0
        %904 = vmatprep.subr.bf16.mxu0 0
        %905 = vmatpush1.bf16.msra.mxu0 0
        %906 = vmatprep.subr.bf16.mxu0 0
        %907 = vmatpush1.bf16.msra.mxu0 0
        %908 = vmatprep.subr.bf16.mxu0 0
        %909 = vmatpush1.bf16.msra.mxu0 0
        %910 = vmatprep.subr.bf16.mxu0 0
        %911 = vmatpush1.bf16.msra.mxu0 0
        %912 = vmatprep.subr.bf16.mxu0 0
        %913 = vmatpush1.bf16.msra.mxu0 0
        %914 = vmatprep.subr.bf16.mxu0 0
        %915 = vmatpush1.bf16.msra.mxu0 0
        %916 = vmatprep.mubr.bf16.mxu0 0
        %917 = vmatmul.mubr.bf16.gmra.mrb[0].mxu0 %v654
        %v918 = vpop.f32.mrb[0].mxu0
        %v919 = vadd.f32 0.0, %v918
        %v920 = vpop.f32.mrb[0].mxu0
        %v921 = vpop.f32.mrb[0].mxu0
        %v922 = vadd.f32 0.0, %v921
        %v923 = vpop.f32.mrb[0].mxu0
        %924 = vmatprep.mubr.bf16.mxu0 0
        %925 = vmatmul.mubr.bf16.gmra.mrb[0].mxu0 %v657
        %v926 = vpop.f32.mrb[0].mxu0
        %v927 = vadd.f32 0.0, %v926
        %v928 = vpop.f32.mrb[0].mxu0
        %v929 = vpop.f32.mrb[0].mxu0
        %v930 = vadd.f32 0.0, %v929
        %v931 = vpop.f32.mrb[0].mxu0
        %932 = vmatprep.mubr.bf16.mxu0 0
        %933 = vmatmul.mubr.bf16.gmra.mrb[0].mxu0 %v660
        %v934 = vpop.f32.mrb[0].mxu0
        %v935 = vadd.f32 0.0, %v934
        %v936 = vpop.f32.mrb[0].mxu0
        %v937 = vpop.f32.mrb[0].mxu0
        %v938 = vadd.f32 0.0, %v937
        %v939 = vpop.f32.mrb[0].mxu0
        %940 = vmatprep.mubr.bf16.mxu0 0
        %941 = vmatmul.mubr.bf16.gmra.mrb[0].mxu0 %v663
        %v942 = vpop.f32.mrb[0].mxu0
        %v943 = vadd.f32 0.0, %v942
        %v944 = vpop.f32.mrb[0].mxu0
        %v945 = vpop.f32.mrb[0].mxu0
        %v946 = vadd.f32 0.0, %v945
        %v947 = vpop.f32.mrb[0].mxu0
        %948 = vmatprep.mubr.bf16.mxu0 0
        %949 = vmatmul.mubr.bf16.gmra.mrb[0].mxu0 %v666
        %v950 = vpop.f32.mrb[0].mxu0
        %v951 = vadd.f32 0.0, %v950
        %v952 = vpop.f32.mrb[0].mxu0
        %v953 = vpop.f32.mrb[0].mxu0
        %v954 = vadd.f32 0.0, %v953
        %v955 = vpop.f32.mrb[0].mxu0
        %956 = vmatprep.mubr.bf16.mxu0 0
        %957 = vmatmul.mubr.bf16.gmra.mrb[0].mxu0 %v669
        %v958 = vpop.f32.mrb[0].mxu0
        %v959 = vadd.f32 0.0, %v958
        %v960 = vpop.f32.mrb[0].mxu0
        %v961 = vpop.f32.mrb[0].mxu0
        %v962 = vadd.f32 0.0, %v961
        %v963 = vpop.f32.mrb[0].mxu0
        %964 = vmatprep.mubr.bf16.mxu0 0
        %965 = vmatmul.mubr.bf16.gmra.mrb[0].mxu0 %v672
        %v966 = vpop.f32.mrb[0].mxu0
        %v967 = vadd.f32 0.0, %v966
        %v968 = vpop.f32.mrb[0].mxu0
        %v969 = vpop.f32.mrb[0].mxu0
        %v970 = vadd.f32 0.0, %v969
        %v971 = vpop.f32.mrb[0].mxu0
        %972 = vmatprep.mubr.bf16.mxu0 0
        %973 = vmatmul.mubr.bf16.gmra.mrb[0].mxu0 %v879
        %v974 = vpop.f32.mrb[0].mxu0
        %v975 = vadd.f32 0.0, %v974
        %v976 = vpop.f32.mrb[0].mxu0
        %v977 = vpop.f32.mrb[0].mxu0
        %v978 = vadd.f32 0.0, %v977
        %v979 = vpop.f32.mrb[0].mxu0
        %980 = vdwg.mxu0
        %997 = vrot.lane.b32.xlu0 %v712, 2
        %v998 = vpop.permute.xlu0 %997
        %999 = vrot.lane.b32.xlu0 %v715, 2
        %v1000 = vpop.permute.xlu0 %999
        %1001 = vrot.lane.b32.xlu0 %v720, 2
        %v1002 = vpop.permute.xlu0 %1001
        %1003 = vrot.lane.b32.xlu0 %v723, 2
        %v1004 = vpop.permute.xlu0 %1003
        %1005 = vrot.lane.b32.xlu0 %v728, 2
        %v1006 = vpop.permute.xlu0 %1005
        %1007 = vrot.lane.b32.xlu0 %v731, 2
        %v1008 = vpop.permute.xlu0 %1007
        %1009 = vrot.lane.b32.xlu0 %v736, 2
        %v1010 = vpop.permute.xlu0 %1009
        %1011 = vrot.lane.b32.xlu0 %v739, 2
        %v1012 = vpop.permute.xlu0 %1011
        %1013 = vrot.lane.b32.xlu0 %v744, 2
        %v1014 = vpop.permute.xlu0 %1013
        %1015 = vrot.lane.b32.xlu0 %v747, 2
        %v1016 = vpop.permute.xlu0 %1015
        %1017 = vrot.lane.b32.xlu0 %v752, 2
        %v1018 = vpop.permute.xlu0 %1017
        %1019 = vrot.lane.b32.xlu0 %v755, 2
        %v1020 = vpop.permute.xlu0 %1019
        %1021 = vrot.lane.b32.xlu0 %v760, 2
        %v1022 = vpop.permute.xlu0 %1021
        %1023 = vrot.lane.b32.xlu0 %v763, 2
        %v1024 = vpop.permute.xlu0 %1023
        %1025 = vrot.lane.b32.xlu0 %v768, 2
        %v1026 = vpop.permute.xlu0 %1025
        %1027 = vrot.lane.b32.xlu0 %v771, 2
        %v1028 = vpop.permute.xlu0 %1027
        %v1045 = vadd.f32 %v587, %v998
        %v1046 = vadd.f32 %v590, %v1000
        %v1047 = vadd.f32 %v595, %v1002
        %v1048 = vadd.f32 %v598, %v1004
        %v1049 = vadd.f32 %v603, %v1006
        %v1050 = vadd.f32 %v606, %v1008
        %v1051 = vadd.f32 %v611, %v1010
        %v1052 = vadd.f32 %v614, %v1012
        %v1053 = vadd.f32 %v619, %v1014
        %v1054 = vadd.f32 %v622, %v1016
        %v1055 = vadd.f32 %v627, %v1018
        %v1056 = vadd.f32 %v630, %v1020
        %v1057 = vadd.f32 %v635, %v1022
        %v1058 = vadd.f32 %v638, %v1024
        %v1059 = vadd.f32 %v643, %v1026
        %v1060 = vadd.f32 %v646, %v1028
        %1077 = vrot.lane.b32.xlu0 %v815, 4
        %v1078 = vpop.permute.xlu0 %1077
        %1079 = vrot.lane.b32.xlu0 %v818, 4
        %v1080 = vpop.permute.xlu0 %1079
        %1081 = vrot.lane.b32.xlu0 %v823, 4
        %v1082 = vpop.permute.xlu0 %1081
        %1083 = vrot.lane.b32.xlu0 %v826, 4
        %v1084 = vpop.permute.xlu0 %1083
        %1085 = vrot.lane.b32.xlu0 %v831, 4
        %v1086 = vpop.permute.xlu0 %1085
        %1087 = vrot.lane.b32.xlu0 %v834, 4
        %v1088 = vpop.permute.xlu0 %1087
        %1089 = vrot.lane.b32.xlu0 %v839, 4
        %v1090 = vpop.permute.xlu0 %1089
        %1091 = vrot.lane.b32.xlu0 %v842, 4
        %v1092 = vpop.permute.xlu0 %1091
        %1093 = vrot.lane.b32.xlu0 %v847, 4
        %v1094 = vpop.permute.xlu0 %1093
        %1095 = vrot.lane.b32.xlu0 %v850, 4
        %v1096 = vpop.permute.xlu0 %1095
        %1097 = vrot.lane.b32.xlu0 %v855, 4
        %v1098 = vpop.permute.xlu0 %1097
        %1099 = vrot.lane.b32.xlu0 %v858, 4
        %v1100 = vpop.permute.xlu0 %1099
        %1101 = vrot.lane.b32.xlu0 %v863, 4
        %v1102 = vpop.permute.xlu0 %1101
        %1103 = vrot.lane.b32.xlu0 %v866, 4
        %v1104 = vpop.permute.xlu0 %1103
        %1105 = vrot.lane.b32.xlu0 %v871, 4
        %v1106 = vpop.permute.xlu0 %1105
        %1107 = vrot.lane.b32.xlu0 %v874, 4
        %v1108 = vpop.permute.xlu0 %1107
        %v1125 = vadd.f32 %v587, %v1078
        %v1126 = vadd.f32 %v590, %v1080
        %v1127 = vadd.f32 %v595, %v1082
        %v1128 = vadd.f32 %v598, %v1084
        %v1129 = vadd.f32 %v603, %v1086
        %v1130 = vadd.f32 %v606, %v1088
        %v1131 = vadd.f32 %v611, %v1090
        %v1132 = vadd.f32 %v614, %v1092
        %v1133 = vadd.f32 %v619, %v1094
        %v1134 = vadd.f32 %v622, %v1096
        %v1135 = vadd.f32 %v627, %v1098
        %v1136 = vadd.f32 %v630, %v1100
        %v1137 = vadd.f32 %v635, %v1102
        %v1138 = vadd.f32 %v638, %v1104
        %v1139 = vadd.f32 %v643, %v1106
        %v1140 = vadd.f32 %v646, %v1108
        %1141 = vrot.lane.b32.xlu0 %v712, 4
        %v1142 = vpop.permute.xlu0 %1141
        %1143 = vrot.lane.b32.xlu0 %v715, 4
        %v1144 = vpop.permute.xlu0 %1143
        %1145 = vrot.lane.b32.xlu0 %v720, 4
        %v1146 = vpop.permute.xlu0 %1145
        %1147 = vrot.lane.b32.xlu0 %v723, 4
        %v1148 = vpop.permute.xlu0 %1147
        %1149 = vrot.lane.b32.xlu0 %v728, 4
        %v1150 = vpop.permute.xlu0 %1149
        %1151 = vrot.lane.b32.xlu0 %v731, 4
        %v1152 = vpop.permute.xlu0 %1151
        %1153 = vrot.lane.b32.xlu0 %v736, 4
        %v1154 = vpop.permute.xlu0 %1153
        %1155 = vrot.lane.b32.xlu0 %v739, 4
        %v1156 = vpop.permute.xlu0 %1155
        %1157 = vrot.lane.b32.xlu0 %v744, 4
        %v1158 = vpop.permute.xlu0 %1157
        %1159 = vrot.lane.b32.xlu0 %v747, 4
        %v1160 = vpop.permute.xlu0 %1159
        %1161 = vrot.lane.b32.xlu0 %v752, 4
        %v1162 = vpop.permute.xlu0 %1161
        %1163 = vrot.lane.b32.xlu0 %v755, 4
        %v1164 = vpop.permute.xlu0 %1163
        %1165 = vrot.lane.b32.xlu0 %v760, 4
        %v1166 = vpop.permute.xlu0 %1165
        %1167 = vrot.lane.b32.xlu0 %v763, 4
        %v1168 = vpop.permute.xlu0 %1167
        %1169 = vrot.lane.b32.xlu0 %v768, 4
        %v1170 = vpop.permute.xlu0 %1169
        %1171 = vrot.lane.b32.xlu0 %v771, 4
        %v1172 = vpop.permute.xlu0 %1171
        %v1189 = vadd.f32 %v587, %v1142
        %v1190 = vadd.f32 %v590, %v1144
        %v1191 = vadd.f32 %v595, %v1146
        %v1192 = vadd.f32 %v598, %v1148
        %v1193 = vadd.f32 %v603, %v1150
        %v1194 = vadd.f32 %v606, %v1152
        %v1195 = vadd.f32 %v611, %v1154
        %v1196 = vadd.f32 %v614, %v1156
        %v1197 = vadd.f32 %v619, %v1158
        %v1198 = vadd.f32 %v622, %v1160
        %v1199 = vadd.f32 %v627, %v1162
        %v1200 = vadd.f32 %v630, %v1164
        %v1201 = vadd.f32 %v635, %v1166
        %v1202 = vadd.f32 %v638, %v1168
        %v1203 = vadd.f32 %v643, %v1170
        %v1204 = vadd.f32 %v646, %v1172
        %v1205 = vadd.f32 %v1189, %v1078
        %v1206 = vadd.f32 %v1190, %v1080
        %v1207 = vadd.f32 %v1191, %v1082
        %v1208 = vadd.f32 %v1192, %v1084
        %v1209 = vadd.f32 %v1193, %v1086
        %v1210 = vadd.f32 %v1194, %v1088
        %v1211 = vadd.f32 %v1195, %v1090
        %v1212 = vadd.f32 %v1196, %v1092
        %v1213 = vadd.f32 %v1197, %v1094
        %v1214 = vadd.f32 %v1198, %v1096
        %v1215 = vadd.f32 %v1199, %v1098
        %v1216 = vadd.f32 %v1200, %v1100
        %v1217 = vadd.f32 %v1201, %v1102
        %v1218 = vadd.f32 %v1202, %v1104
        %v1219 = vadd.f32 %v1203, %v1106
        %v1220 = vadd.f32 %v1204, %v1108
        %1237 = vrot.lane.b32.xlu0 %v919, 6
        %v1238 = vpop.permute.xlu0 %1237
        %1239 = vrot.lane.b32.xlu0 %v922, 6
        %v1240 = vpop.permute.xlu0 %1239
        %1241 = vrot.lane.b32.xlu0 %v927, 6
        %v1242 = vpop.permute.xlu0 %1241
        %1243 = vrot.lane.b32.xlu0 %v930, 6
        %v1244 = vpop.permute.xlu0 %1243
        %1245 = vrot.lane.b32.xlu0 %v935, 6
        %v1246 = vpop.permute.xlu0 %1245
        %1247 = vrot.lane.b32.xlu0 %v938, 6
        %v1248 = vpop.permute.xlu0 %1247
        %1249 = vrot.lane.b32.xlu0 %v943, 6
        %v1250 = vpop.permute.xlu0 %1249
        %1251 = vrot.lane.b32.xlu0 %v946, 6
        %v1252 = vpop.permute.xlu0 %1251
        %1253 = vrot.lane.b32.xlu0 %v951, 6
        %v1254 = vpop.permute.xlu0 %1253
        %1255 = vrot.lane.b32.xlu0 %v954, 6
        %v1256 = vpop.permute.xlu0 %1255
        %1257 = vrot.lane.b32.xlu0 %v959, 6
        %v1258 = vpop.permute.xlu0 %1257
        %1259 = vrot.lane.b32.xlu0 %v962, 6
        %v1260 = vpop.permute.xlu0 %1259
        %1261 = vrot.lane.b32.xlu0 %v967, 6
        %v1262 = vpop.permute.xlu0 %1261
        %1263 = vrot.lane.b32.xlu0 %v970, 6
        %v1264 = vpop.permute.xlu0 %1263
        %1265 = vrot.lane.b32.xlu0 %v975, 6
        %v1266 = vpop.permute.xlu0 %1265
        %1267 = vrot.lane.b32.xlu0 %v978, 6
        %v1268 = vpop.permute.xlu0 %1267
        %v1285 = vadd.f32 %v1205, %v1238
        %v1286 = vadd.f32 %v1206, %v1240
        %v1287 = vadd.f32 %v1207, %v1242
        %v1288 = vadd.f32 %v1208, %v1244
        %v1289 = vadd.f32 %v1209, %v1246
        %v1290 = vadd.f32 %v1210, %v1248
        %v1291 = vadd.f32 %v1211, %v1250
        %v1292 = vadd.f32 %v1212, %v1252
        %v1293 = vadd.f32 %v1213, %v1254
        %v1294 = vadd.f32 %v1214, %v1256
        %v1295 = vadd.f32 %v1215, %v1258
        %v1296 = vadd.f32 %v1216, %v1260
        %v1297 = vadd.f32 %v1217, %v1262
        %v1298 = vadd.f32 %v1218, %v1264
        %v1299 = vadd.f32 %v1219, %v1266
        %v1300 = vadd.f32 %v1220, %v1268
        %vm1301 = vcmask 15360
        %v1302 = vsel %vm1301, %v587, %v1045
        %v1303 = vsel %vm1301, %v590, %v1046
        %v1304 = vsel %vm1301, %v595, %v1047
        %v1305 = vsel %vm1301, %v598, %v1048
        %v1306 = vsel %vm1301, %v603, %v1049
        %v1307 = vsel %vm1301, %v606, %v1050
        %v1308 = vsel %vm1301, %v611, %v1051
        %v1309 = vsel %vm1301, %v614, %v1052
        %v1310 = vsel %vm1301, %v619, %v1053
        %v1311 = vsel %vm1301, %v622, %v1054
        %v1312 = vsel %vm1301, %v627, %v1055
        %v1313 = vsel %vm1301, %v630, %v1056
        %v1314 = vsel %vm1301, %v635, %v1057
        %v1315 = vsel %vm1301, %v638, %v1058
        %v1316 = vsel %vm1301, %v643, %v1059
        %v1317 = vsel %vm1301, %v646, %v1060
        %v1318 = vsel %vm531, %v1302, %v1125
        %v1319 = vsel %vm531, %v1303, %v1126
        %v1320 = vsel %vm531, %v1304, %v1127
        %v1321 = vsel %vm531, %v1305, %v1128
        %v1322 = vsel %vm531, %v1306, %v1129
        %v1323 = vsel %vm531, %v1307, %v1130
        %v1324 = vsel %vm531, %v1308, %v1131
        %v1325 = vsel %vm531, %v1309, %v1132
        %v1326 = vsel %vm531, %v1310, %v1133
        %v1327 = vsel %vm531, %v1311, %v1134
        %v1328 = vsel %vm531, %v1312, %v1135
        %v1329 = vsel %vm531, %v1313, %v1136
        %v1330 = vsel %vm531, %v1314, %v1137
        %v1331 = vsel %vm531, %v1315, %v1138
        %v1332 = vsel %vm531, %v1316, %v1139
        %v1333 = vsel %vm531, %v1317, %v1140
        %vm1334 = vcmask 48128
        %v1335 = vsel %vm1334, %v1318, %v1285
        %v1336 = vsel %vm1334, %v1319, %v1286
        %v1337 = vsel %vm1334, %v1320, %v1287
        %v1338 = vsel %vm1334, %v1321, %v1288
        %v1339 = vsel %vm1334, %v1322, %v1289
        %v1340 = vsel %vm1334, %v1323, %v1290
        %v1341 = vsel %vm1334, %v1324, %v1291
        %v1342 = vsel %vm1334, %v1325, %v1292
        %v1343 = vsel %vm1334, %v1326, %v1293
        %v1344 = vsel %vm1334, %v1327, %v1294
        %v1345 = vsel %vm1334, %v1328, %v1295
        %v1346 = vsel %vm1334, %v1329, %v1296
        %v1347 = vsel %vm1334, %v1330, %v1297
        %v1348 = vsel %vm1334, %v1331, %v1298
        %v1349 = vsel %vm1334, %v1332, %v1299
        %v1350 = vsel %vm1334, %v1333, %v1300
        %p1351 = scmp.eq.s32.totalorder %s33, 0
        // Predicated region
        $region69: #{tpu_custom_call.1} parent=43 // pred_check
          %p1352 = pneg %p1351
        $region70: #{tpu_custom_call.1} parent=43 // pred_check_branch
          %1354 = sbr.rel (%p1352) target = $region72
        $region71: #{tpu_custom_call.1} parent=43 // pred_region
          %vm1355 = vcmask 57344
          %1356 = vst.msk [vmem:[#allocation2] sm:$0x1] %vm1355, 0.0
          %1357 = vst.msk [vmem:[#allocation3] sm:$0x1] %vm1355, 0.0
        $region72: #{tpu_custom_call.1} parent=43 // pred_fallthru
          _
        %s1358 = smul.u32 %s33, 128
        %s1359 = scalar_lea.vmem %s380, %s1358 [#allocation15]
        %vm1360 = vcmask 64512
        %1361 = vst.msk [vmem:[%s1359] sm:$0xff] %vm1360, %v1335
        %1362 = vst.msk [vmem:[%s1359 + $0x8] sm:$0xff] %vm1360, %v1336
        %1363 = vst.msk [vmem:[%s1359 + $0x10] sm:$0xff] %vm1360, %v1337
        %1364 = vst.msk [vmem:[%s1359 + $0x18] sm:$0xff] %vm1360, %v1338
        %1365 = vst.msk [vmem:[%s1359 + $0x20] sm:$0xff] %vm1360, %v1339
        %1366 = vst.msk [vmem:[%s1359 + $0x28] sm:$0xff] %vm1360, %v1340
        %1367 = vst.msk [vmem:[%s1359 + $0x30] sm:$0xff] %vm1360, %v1341
        %1368 = vst.msk [vmem:[%s1359 + $0x38] sm:$0xff] %vm1360, %v1342
        %1369 = vst.msk [vmem:[%s1359 + $0x40] sm:$0xff] %vm1360, %v1343
        %1370 = vst.msk [vmem:[%s1359 + $0x48] sm:$0xff] %vm1360, %v1344
        %1371 = vst.msk [vmem:[%s1359 + $0x50] sm:$0xff] %vm1360, %v1345
        %1372 = vst.msk [vmem:[%s1359 + $0x58] sm:$0xff] %vm1360, %v1346
        %1373 = vst.msk [vmem:[%s1359 + $0x60] sm:$0xff] %vm1360, %v1347
        %1374 = vst.msk [vmem:[%s1359 + $0x68] sm:$0xff] %vm1360, %v1348
        %1375 = vst.msk [vmem:[%s1359 + $0x70] sm:$0xff] %vm1360, %v1349
        %1376 = vst.msk [vmem:[%s1359 + $0x78] sm:$0xff] %vm1360, %v1350
        %v1377 = vld [vmem:[#allocation2] sm:$0x1]
        %v1378 = vsel %vm1360, %v1335, 0.0
        %v1379 = vsel %vm1360, %v1336, 0.0
        %v1380 = vadd.f32 %v1378, %v1379
        %v1381 = vsel %vm1360, %v1337, 0.0
        %v1382 = vadd.f32 %v1380, %v1381
        %v1383 = vsel %vm1360, %v1338, 0.0
        %v1384 = vadd.f32 %v1382, %v1383
        %v1385 = vsel %vm1360, %v1339, 0.0
        %v1386 = vadd.f32 %v1384, %v1385
        %v1387 = vsel %vm1360, %v1340, 0.0
        %v1388 = vadd.f32 %v1386, %v1387
        %v1389 = vsel %vm1360, %v1341, 0.0
        %v1390 = vadd.f32 %v1388, %v1389
        %v1391 = vsel %vm1360, %v1342, 0.0
        %v1392 = vadd.f32 %v1390, %v1391
        %v1393 = vsel %vm1360, %v1343, 0.0
        %v1394 = vadd.f32 %v1392, %v1393
        %v1395 = vsel %vm1360, %v1344, 0.0
        %v1396 = vadd.f32 %v1394, %v1395
        %v1397 = vsel %vm1360, %v1345, 0.0
        %v1398 = vadd.f32 %v1396, %v1397
        %v1399 = vsel %vm1360, %v1346, 0.0
        %v1400 = vadd.f32 %v1398, %v1399
        %v1401 = vsel %vm1360, %v1347, 0.0
        %v1402 = vadd.f32 %v1400, %v1401
        %v1403 = vsel %vm1360, %v1348, 0.0
        %v1404 = vadd.f32 %v1402, %v1403
        %v1405 = vsel %vm1360, %v1349, 0.0
        %v1406 = vadd.f32 %v1404, %v1405
        %v1407 = vsel %vm1360, %v1350, 0.0
        %v1408 = vadd.f32 %v1406, %v1407
        %v1409 = vrot.slane %v1408, 4
        %v1410 = vadd.f32 %v1408, %v1409
        %v1411 = vrot.slane %v1410, 2
        %v1412 = vadd.f32 %v1410, %v1411
        %v1413 = vrot.slane %v1412, 1
        %v1414 = vadd.f32 %v1412, %v1413
        %v1415 = vadd.f32 %v1377, %v1414
        %vm1416 = vcmask 57344
        %1417 = vst.msk [vmem:[#allocation2] sm:$0x1] %vm1416, %v1415
        %v1418 = vld [vmem:[#allocation3] sm:$0x1]
        %v1419 = vmul.f32 %v1335, %v1335
        %v1420 = vmul.f32 %v1336, %v1336
        %v1421 = vmul.f32 %v1337, %v1337
        %v1422 = vmul.f32 %v1338, %v1338
        %v1423 = vmul.f32 %v1339, %v1339
        %v1424 = vmul.f32 %v1340, %v1340
        %v1425 = vmul.f32 %v1341, %v1341
        %v1426 = vmul.f32 %v1342, %v1342
        %v1427 = vmul.f32 %v1343, %v1343
        %v1428 = vmul.f32 %v1344, %v1344
        %v1429 = vmul.f32 %v1345, %v1345
        %v1430 = vmul.f32 %v1346, %v1346
        %v1431 = vmul.f32 %v1347, %v1347
        %v1432 = vmul.f32 %v1348, %v1348
        %v1433 = vmul.f32 %v1349, %v1349
        %v1434 = vmul.f32 %v1350, %v1350
        %v1435 = vsel %vm1360, %v1419, 0.0
        %v1436 = vsel %vm1360, %v1420, 0.0
        %v1437 = vadd.f32 %v1435, %v1436
        %v1438 = vsel %vm1360, %v1421, 0.0
        %v1439 = vadd.f32 %v1437, %v1438
        %v1440 = vsel %vm1360, %v1422, 0.0
        %v1441 = vadd.f32 %v1439, %v1440
        %v1442 = vsel %vm1360, %v1423, 0.0
        %v1443 = vadd.f32 %v1441, %v1442
        %v1444 = vsel %vm1360, %v1424, 0.0
        %v1445 = vadd.f32 %v1443, %v1444
        %v1446 = vsel %vm1360, %v1425, 0.0
        %v1447 = vadd.f32 %v1445, %v1446
        %v1448 = vsel %vm1360, %v1426, 0.0
        %v1449 = vadd.f32 %v1447, %v1448
        %v1450 = vsel %vm1360, %v1427, 0.0
        %v1451 = vadd.f32 %v1449, %v1450
        %v1452 = vsel %vm1360, %v1428, 0.0
        %v1453 = vadd.f32 %v1451, %v1452
        %v1454 = vsel %vm1360, %v1429, 0.0
        %v1455 = vadd.f32 %v1453, %v1454
        %v1456 = vsel %vm1360, %v1430, 0.0
        %v1457 = vadd.f32 %v1455, %v1456
        %v1458 = vsel %vm1360, %v1431, 0.0
        %v1459 = vadd.f32 %v1457, %v1458
        %v1460 = vsel %vm1360, %v1432, 0.0
        %v1461 = vadd.f32 %v1459, %v1460
        %v1462 = vsel %vm1360, %v1433, 0.0
        %v1463 = vadd.f32 %v1461, %v1462
        %v1464 = vsel %vm1360, %v1434, 0.0
        %v1465 = vadd.f32 %v1463, %v1464
        %v1466 = vrot.slane %v1465, 4
        %v1467 = vadd.f32 %v1465, %v1466
        %v1468 = vrot.slane %v1467, 2
        %v1469 = vadd.f32 %v1467, %v1468
        %v1470 = vrot.slane %v1469, 1
        %v1471 = vadd.f32 %v1469, %v1470
        %v1472 = vadd.f32 %v1418, %v1471
        %1473 = vst.msk [vmem:[#allocation3] sm:$0x1] %vm1416, %v1472
        %p1474 = scmp.eq.s32.totalorder %s33, 1
        // Predicated region
        $region73: #{tpu_custom_call.1} parent=43 // pred_check
          %p1475 = pneg %p1474
        $region74: #{tpu_custom_call.1} parent=43 // pred_check_branch
          %1477 = sbr.rel (%p1475) target = $region76
        $region75: #{tpu_custom_call.1} parent=43 // pred_region
          %v1478 = vld [vmem:[#allocation2] sm:$0x1]
          %v1479 = vld [vmem:[#allocation3] sm:$0x1]
          %1481 = vrot.lane.b32.xlu0 %v1478, 126
          %v1482 = vpop.permute.xlu0 %1481
          %v1484 = vadd.f32 %v1478, %v1482
          %1485 = vrot.lane.b32.xlu0 %v1478, 124
          %v1486 = vpop.permute.xlu0 %1485
          %v1488 = vadd.f32 %v1484, %v1486
          %1489 = vrot.lane.b32.xlu0 %v1478, 122
          %v1490 = vpop.permute.xlu0 %1489
          %v1492 = vadd.f32 %v1488, %v1490
          %1494 = vrot.lane.b32.xlu0 %v1479, 126
          %v1495 = vpop.permute.xlu0 %1494
          %v1497 = vadd.f32 %v1479, %v1495
          %1498 = vrot.lane.b32.xlu0 %v1479, 124
          %v1499 = vpop.permute.xlu0 %1498
          %v1501 = vadd.f32 %v1497, %v1499
          %1502 = vrot.lane.b32.xlu0 %v1479, 122
          %v1503 = vpop.permute.xlu0 %1502
          %v1505 = vadd.f32 %v1501, %v1503
          %v1506 = vmul.f32 %v1492, 0.0009765625
          %v1507 = vmul.f32 %v1505, 0.0009765625
          %v1508 = vmul.f32 %v1506, %v1506
          %v1509 = vsub.f32 %v1507, %v1508
          %v1510 = vmax.f32 %v1509, 0.0
          %v1511 = vadd.f32 %v1510, 1e-05
          %v1512 = vrsqrt.pop %v1511
          %v1514 = vlaneseq
          %v1515 = vshrl.u32 %v1514, 7
          %v1516 = vsub.s32 0, %v1515
          %v1517 = vrot.slane %v1506, %v1516
          %1518 = vrot.lane.b32.xlu0 %v1517, 2
          %v1519 = vpop.permute.xlu0 %1518
          %1521 = vrot.lane.b32.xlu0 %v1517, 4
          %v1522 = vpop.permute.xlu0 %1521
          %1524 = vrot.lane.b32.xlu0 %v1517, 6
          %v1525 = vpop.permute.xlu0 %1524
          %v1527 = vsel %vm1301, %v1506, %v1519
          %v1528 = vsel %vm531, %v1527, %v1522
          %v1529 = vsel %vm1334, %v1528, %v1525
          %v1531 = vlaneseq
          %v1532 = vshrl.u32 %v1531, 7
          %v1533 = vsub.s32 0, %v1532
          %v1534 = vrot.slane %v1512, %v1533
          %1535 = vrot.lane.b32.xlu0 %v1534, 2
          %v1536 = vpop.permute.xlu0 %1535
          %1538 = vrot.lane.b32.xlu0 %v1534, 4
          %v1539 = vpop.permute.xlu0 %1538
          %1541 = vrot.lane.b32.xlu0 %v1534, 6
          %v1542 = vpop.permute.xlu0 %1541
          %v1544 = vsel %vm1301, %v1512, %v1536
          %v1545 = vsel %vm531, %v1544, %v1539
          %v1546 = vsel %vm1334, %v1545, %v1542
          %v1547 = vld [vmem:[%s380] sm:$0xff]
          %v1548 = vld [vmem:[%s380 + $0x8] sm:$0xff]
          %v1549 = vld [vmem:[%s380 + $0x10] sm:$0xff]
          %v1550 = vld [vmem:[%s380 + $0x18] sm:$0xff]
          %v1551 = vld [vmem:[%s380 + $0x20] sm:$0xff]
          %v1552 = vld [vmem:[%s380 + $0x28] sm:$0xff]
          %v1553 = vld [vmem:[%s380 + $0x30] sm:$0xff]
          %v1554 = vld [vmem:[%s380 + $0x38] sm:$0xff]
          %v1555 = vld [vmem:[%s380 + $0x40] sm:$0xff]
          %v1556 = vld [vmem:[%s380 + $0x48] sm:$0xff]
          %v1557 = vld [vmem:[%s380 + $0x50] sm:$0xff]
          %v1558 = vld [vmem:[%s380 + $0x58] sm:$0xff]
          %v1559 = vld [vmem:[%s380 + $0x60] sm:$0xff]
          %v1560 = vld [vmem:[%s380 + $0x68] sm:$0xff]
          %v1561 = vld [vmem:[%s380 + $0x70] sm:$0xff]
          %v1562 = vld [vmem:[%s380 + $0x78] sm:$0xff]
          %v1563 = vld [vmem:[%s380 + $0x80] sm:$0xff]
          %v1564 = vld [vmem:[%s380 + $0x88] sm:$0xff]
          %v1565 = vld [vmem:[%s380 + $0x90] sm:$0xff]
          %v1566 = vld [vmem:[%s380 + $0x98] sm:$0xff]
          %v1567 = vld [vmem:[%s380 + $0xa0] sm:$0xff]
          %v1568 = vld [vmem:[%s380 + $0xa8] sm:$0xff]
          %v1569 = vld [vmem:[%s380 + $0xb0] sm:$0xff]
          %v1570 = vld [vmem:[%s380 + $0xb8] sm:$0xff]
          %v1571 = vld [vmem:[%s380 + $0xc0] sm:$0xff]
          %v1572 = vld [vmem:[%s380 + $0xc8] sm:$0xff]
          %v1573 = vld [vmem:[%s380 + $0xd0] sm:$0xff]
          %v1574 = vld [vmem:[%s380 + $0xd8] sm:$0xff]
          %v1575 = vld [vmem:[%s380 + $0xe0] sm:$0xff]
          %v1576 = vld [vmem:[%s380 + $0xe8] sm:$0xff]
          %v1577 = vld [vmem:[%s380 + $0xf0] sm:$0xff]
          %v1578 = vld [vmem:[%s380 + $0xf8] sm:$0xff]
          %v1579 = vlaneseq
          %v1580 = vshrl.u32 %v1579, 7
          %v1581 = vsub.s32 0, %v1580
          %v1582 = vrot.slane %v1529, %v1581
          %v1583 = vsub.f32 %v1547, %v1582
          %v1584 = vsub.f32 %v1548, %v1582
          %v1585 = vsub.f32 %v1549, %v1582
          %v1586 = vsub.f32 %v1550, %v1582
          %v1587 = vsub.f32 %v1551, %v1582
          %v1588 = vsub.f32 %v1552, %v1582
          %v1589 = vsub.f32 %v1553, %v1582
          %v1590 = vsub.f32 %v1554, %v1582
          %v1591 = vsub.f32 %v1555, %v1582
          %v1592 = vsub.f32 %v1556, %v1582
          %v1593 = vsub.f32 %v1557, %v1582
          %v1594 = vsub.f32 %v1558, %v1582
          %v1595 = vsub.f32 %v1559, %v1582
          %v1596 = vsub.f32 %v1560, %v1582
          %v1597 = vsub.f32 %v1561, %v1582
          %v1598 = vsub.f32 %v1562, %v1582
          %v1599 = vsub.f32 %v1563, %v1582
          %v1600 = vsub.f32 %v1564, %v1582
          %v1601 = vsub.f32 %v1565, %v1582
          %v1602 = vsub.f32 %v1566, %v1582
          %v1603 = vsub.f32 %v1567, %v1582
          %v1604 = vsub.f32 %v1568, %v1582
          %v1605 = vsub.f32 %v1569, %v1582
          %v1606 = vsub.f32 %v1570, %v1582
          %v1607 = vsub.f32 %v1571, %v1582
          %v1608 = vsub.f32 %v1572, %v1582
          %v1609 = vsub.f32 %v1573, %v1582
          %v1610 = vsub.f32 %v1574, %v1582
          %v1611 = vsub.f32 %v1575, %v1582
          %v1612 = vsub.f32 %v1576, %v1582
          %v1613 = vsub.f32 %v1577, %v1582
          %v1614 = vsub.f32 %v1578, %v1582
          %v1615 = vlaneseq
          %v1616 = vshrl.u32 %v1615, 7
          %v1617 = vsub.s32 0, %v1616
          %v1618 = vrot.slane %v1546, %v1617
          %v1619 = vmul.f32 %v1583, %v1618
          %v1620 = vmul.f32 %v1584, %v1618
          %v1621 = vmul.f32 %v1585, %v1618
          %v1622 = vmul.f32 %v1586, %v1618
          %v1623 = vmul.f32 %v1587, %v1618
          %v1624 = vmul.f32 %v1588, %v1618
          %v1625 = vmul.f32 %v1589, %v1618
          %v1626 = vmul.f32 %v1590, %v1618
          %v1627 = vmul.f32 %v1591, %v1618
          %v1628 = vmul.f32 %v1592, %v1618
          %v1629 = vmul.f32 %v1593, %v1618
          %v1630 = vmul.f32 %v1594, %v1618
          %v1631 = vmul.f32 %v1595, %v1618
          %v1632 = vmul.f32 %v1596, %v1618
          %v1633 = vmul.f32 %v1597, %v1618
          %v1634 = vmul.f32 %v1598, %v1618
          %v1635 = vmul.f32 %v1599, %v1618
          %v1636 = vmul.f32 %v1600, %v1618
          %v1637 = vmul.f32 %v1601, %v1618
          %v1638 = vmul.f32 %v1602, %v1618
          %v1639 = vmul.f32 %v1603, %v1618
          %v1640 = vmul.f32 %v1604, %v1618
          %v1641 = vmul.f32 %v1605, %v1618
          %v1642 = vmul.f32 %v1606, %v1618
          %v1643 = vmul.f32 %v1607, %v1618
          %v1644 = vmul.f32 %v1608, %v1618
          %v1645 = vmul.f32 %v1609, %v1618
          %v1646 = vmul.f32 %v1610, %v1618
          %v1647 = vmul.f32 %v1611, %v1618
          %v1648 = vmul.f32 %v1612, %v1618
          %v1649 = vmul.f32 %v1613, %v1618
          %v1650 = vmul.f32 %v1614, %v1618
          %v1651 = vmax.f32 %v1619, 0.0
          %v1652 = vmax.f32 %v1620, 0.0
          %v1653 = vmax.f32 %v1621, 0.0
          %v1654 = vmax.f32 %v1622, 0.0
          %v1655 = vmax.f32 %v1623, 0.0
          %v1656 = vmax.f32 %v1624, 0.0
          %v1657 = vmax.f32 %v1625, 0.0
          %v1658 = vmax.f32 %v1626, 0.0
          %v1659 = vmax.f32 %v1627, 0.0
          %v1660 = vmax.f32 %v1628, 0.0
          %v1661 = vmax.f32 %v1629, 0.0
          %v1662 = vmax.f32 %v1630, 0.0
          %v1663 = vmax.f32 %v1631, 0.0
          %v1664 = vmax.f32 %v1632, 0.0
          %v1665 = vmax.f32 %v1633, 0.0
          %v1666 = vmax.f32 %v1634, 0.0
          %v1667 = vmax.f32 %v1635, 0.0
          %v1668 = vmax.f32 %v1636, 0.0
          %v1669 = vmax.f32 %v1637, 0.0
          %v1670 = vmax.f32 %v1638, 0.0
          %v1671 = vmax.f32 %v1639, 0.0
          %v1672 = vmax.f32 %v1640, 0.0
          %v1673 = vmax.f32 %v1641, 0.0
          %v1674 = vmax.f32 %v1642, 0.0
          %v1675 = vmax.f32 %v1643, 0.0
          %v1676 = vmax.f32 %v1644, 0.0
          %v1677 = vmax.f32 %v1645, 0.0
          %v1678 = vmax.f32 %v1646, 0.0
          %v1679 = vmax.f32 %v1647, 0.0
          %v1680 = vmax.f32 %v1648, 0.0
          %v1681 = vmax.f32 %v1649, 0.0
          %v1682 = vmax.f32 %v1650, 0.0
          %1683 = vst.msk [vmem:[%s380] sm:$0xff] %vm1360, %v1651
          %1684 = vst.msk [vmem:[%s380 + $0x8] sm:$0xff] %vm1360, %v1652
          %1685 = vst.msk [vmem:[%s380 + $0x10] sm:$0xff] %vm1360, %v1653
          %1686 = vst.msk [vmem:[%s380 + $0x18] sm:$0xff] %vm1360, %v1654
          %1687 = vst.msk [vmem:[%s380 + $0x20] sm:$0xff] %vm1360, %v1655
          %1688 = vst.msk [vmem:[%s380 + $0x28] sm:$0xff] %vm1360, %v1656
          %1689 = vst.msk [vmem:[%s380 + $0x30] sm:$0xff] %vm1360, %v1657
          %1690 = vst.msk [vmem:[%s380 + $0x38] sm:$0xff] %vm1360, %v1658
          %1691 = vst.msk [vmem:[%s380 + $0x40] sm:$0xff] %vm1360, %v1659
          %1692 = vst.msk [vmem:[%s380 + $0x48] sm:$0xff] %vm1360, %v1660
          %1693 = vst.msk [vmem:[%s380 + $0x50] sm:$0xff] %vm1360, %v1661
          %1694 = vst.msk [vmem:[%s380 + $0x58] sm:$0xff] %vm1360, %v1662
          %1695 = vst.msk [vmem:[%s380 + $0x60] sm:$0xff] %vm1360, %v1663
          %1696 = vst.msk [vmem:[%s380 + $0x68] sm:$0xff] %vm1360, %v1664
          %1697 = vst.msk [vmem:[%s380 + $0x70] sm:$0xff] %vm1360, %v1665
          %1698 = vst.msk [vmem:[%s380 + $0x78] sm:$0xff] %vm1360, %v1666
          %1699 = vst.msk [vmem:[%s380 + $0x80] sm:$0xff] %vm1360, %v1667
          %1700 = vst.msk [vmem:[%s380 + $0x88] sm:$0xff] %vm1360, %v1668
          %1701 = vst.msk [vmem:[%s380 + $0x90] sm:$0xff] %vm1360, %v1669
          %1702 = vst.msk [vmem:[%s380 + $0x98] sm:$0xff] %vm1360, %v1670
          %1703 = vst.msk [vmem:[%s380 + $0xa0] sm:$0xff] %vm1360, %v1671
          %1704 = vst.msk [vmem:[%s380 + $0xa8] sm:$0xff] %vm1360, %v1672
          %1705 = vst.msk [vmem:[%s380 + $0xb0] sm:$0xff] %vm1360, %v1673
          %1706 = vst.msk [vmem:[%s380 + $0xb8] sm:$0xff] %vm1360, %v1674
          %1707 = vst.msk [vmem:[%s380 + $0xc0] sm:$0xff] %vm1360, %v1675
          %1708 = vst.msk [vmem:[%s380 + $0xc8] sm:$0xff] %vm1360, %v1676
          %1709 = vst.msk [vmem:[%s380 + $0xd0] sm:$0xff] %vm1360, %v1677
          %1710 = vst.msk [vmem:[%s380 + $0xd8] sm:$0xff] %vm1360, %v1678
          %1711 = vst.msk [vmem:[%s380 + $0xe0] sm:$0xff] %vm1360, %v1679
          %1712 = vst.msk [vmem:[%s380 + $0xe8] sm:$0xff] %vm1360, %v1680
          %1713 = vst.msk [vmem:[%s380 + $0xf0] sm:$0xff] %vm1360, %v1681
          %1714 = vst.msk [vmem:[%s380 + $0xf8] sm:$0xff] %vm1360, %v1682
        $region76: #{tpu_custom_call.1} parent=43 // pred_fallthru
          _
        %s1715 = sand.u32 %s188, 1
        %s1716 = scalar_lea.sflag [#allocation6], %s1715
        %s1717 = sand.u32 %s188, 1
        %s1718 = smul.addr %s1717, 256
        %s1719 = scalar_lea.vmem [#allocation15], %s1718
        // Predicated region
        $region77: #{tpu_custom_call.1} parent=43 // pred_check
          %p1720 = pneg %p198
        $region78: #{tpu_custom_call.1} parent=43 // pred_check_branch
          %1722 = sbr.rel (%p1720) target = $region80
        $region79: #{tpu_custom_call.1} parent=43 // pred_region
          %s1724 = ssub.s32 4096, 4096
          %1725 = vsyncadd %s1716, %s1724
          %s1726 = smul.addr %s32, 32
          %s1727 = smul.addr %s1726, 128
          %s1728 = scalar_lea.hbm %s6, %s1727
          %s1729 = sshll.u32 %s1719, 4
          %s1730 = int_to_ptr.vmem [resolvable:$true] %s1729
          %1735 = dma.vmem_to_hbm [thread:$0]  %s1730, 4096, %s1728, %s1716, 128, 128, 8
        $region80: #{tpu_custom_call.1} parent=43 // pred_fallthru
          _
      $region44: #{tpu_custom_call.1} parent=5 // pred_fallthru
        _
      %p1736 = scmp.le.s32.totalorder 2, %s23
      // Predicated region
      $region81: #{tpu_custom_call.1} parent=5 // pred_check
        %p1737 = pneg %p1736
      $region82: #{tpu_custom_call.1} parent=5 // pred_check_branch
        %1739 = sbr.rel (%p1737) target = $region84
      $region83: #{tpu_custom_call.1} parent=5 // pred_region
        %s1740 = ssub.s32 %s23, 2
        // Predicated region
        $region85: #{tpu_custom_call.1} parent=83 // pred_check
          %p1741 = pneg %p204
        $region86: #{tpu_custom_call.1} parent=83 // pred_check_branch
          %1743 = sbr.rel (%p1741) target = $region88
        $region87: #{tpu_custom_call.1} parent=83 // pred_region
          %s1744 = sand.u32 %s189, 1
          %s1745 = scalar_lea.sflag [#allocation6], %s1744
          %s1746 = sand.u32 %s189, 1
          %s1747 = smul.addr %s1746, 256
          %s1748 = scalar_lea.vmem [#allocation15], %s1747
          %1749 = dma.done %s1745, 4096
        $region88: #{tpu_custom_call.1} parent=83 // pred_fallthru
          _
      $region84: #{tpu_custom_call.1} parent=5 // pred_fallthru
        _
    $region6: #{tpu_custom_call.1} parent=1 // loop_footer
      %s27 = sadd.s32 1, %s23
    $region7: #{tpu_custom_call.1} parent=1 // loop_footer_branch
      %22 = sbr.rel target = $region3
    $region8: #{tpu_custom_call.1} parent=1 // loop_exit
      _
    %1750 = vsyncpa [#allocation5], 1
    %s1751 = scalar_lea.sflag [#allocation5], 1
    %1752 = vsyncpa %s1751, 1
    %1753 = vsyncpa [#allocation8], 1
    %s1754 = scalar_lea.sflag [#allocation8], 1
    %1755 = vsyncpa %s1754, 1
    %1756 = vsyncpa [#allocation11], 1
    %1757 = vsyncpa [#allocation14], 1
    %1758 = vsyncpa [#allocation6], 1
    %s1759 = scalar_lea.sflag [#allocation6], 1
    %1760 = vsyncpa %s1759, 1

</llo_original>
